<compile_context>
chip_gen: v5e
topology: v5e:2x2
jax: 0.10.0
libtpu: 0.0.40
codegen_flags: <defaults>
</compile_context>

<pallas_src>
import jax
import jax.numpy as jnp
import numpy as np
from jax.experimental import pallas as pl
from jax.experimental.pallas import tpu as pltpu


def _r8(v):
    return -(-v // 8) * 8


def _r128(v):
    return -(-v // 128) * 128


def _make_kernel(Nb, Hh, Wh, Cin, Cout, pad):
    """Kernel processing Nb images per grid step in parity-split channel-major layout."""
    MhB = Nb * Hh * Wh          # lanes per parity plane per grid step (multiple of 128)

    def split(v):               # v in {-1, 0, 1, 2} -> (source parity, pooled-grid shift)
        return v % 2, v // 2

    def stage_planes(planes, C, pscr_ref):
        # Write the four (C, MhB) planes at the 128-aligned interior of the haloed scratch.
        for q in (0, 1):
            for r in (0, 1):
                pscr_ref[2 * q + r, 0:C, pad:pad + MhB] = planes[(q, r)]

    def conv3x3_relu(C, w_ref, b_ref, pscr_ref, col_ref, masks):
        # Input planes are already staged in pscr_ref[:, 0:C, pad:pad+MhB].
        m_top, m_bot, m_left, m_right = masks
        cache = {}

        def fetch(qs, rs, a, b):
            # Neighbour plane (qs, rs) shifted by (a, b) on the pooled grid; dest lanes
            # whose 3x3 tap falls outside the image are selected to 0 (PyTorch zero pad).
            # Only 16 distinct fetches per conv (cached); the slice offsets also cover the
            # row / image crossings, which land exactly on the masked lanes.
            key = (qs, rs, a, b)
            if key in cache:
                return cache[key]
            start = pad + a * Wh + b
            v = pscr_ref[2 * qs + rs, 0:C, start:start + MhB]
            cond = None
            if a == 1:
                cond = m_bot
            elif a == -1:
                cond = m_top
            if b == 1:
                cond = m_right if cond is None else cond * m_right
            elif b == -1:
                cond = m_left if cond is None else cond * m_left
            if cond is not None:
                v = jnp.where(cond > 0.5, v, 0.0)
            cache[key] = v
            return v

        K = 9 * C
        for q in (0, 1):
            for r in (0, 1):
                s = 2 * q + r
                t = 0
                for dy in (-1, 0, 1):
                    qs, a = split(q + dy)
                    for dx in (-1, 0, 1):
                        rs, b = split(r + dx)
                        # Lane-dense store: lane offset s*MhB is a multiple of 128.
                        col_ref[t * C:(t + 1) * C, s * MhB:(s + 1) * MhB] = fetch(qs, rs, a, b)
                        t += 1
        # Single transposed im2col matmul: (Cout, 9C) @ (9C, Nb*H*W) -> lane-dense output.
        y = jnp.dot(w_ref[...], col_ref[0:K, :], preferred_element_type=jnp.float32)
        return jnp.maximum(y + b_ref[...], 0.0)          # (Cout, 4*MhB)

    def kernel(x_ref, m_ref, w1_ref, b1_ref, w2_ref, b2_ref, out_ref, pscr_ref, col_ref):
        masks = (m_ref[0:1, :], m_ref[1:2, :], m_ref[2:3, :], m_ref[3:4, :])

        stage_planes({(q, r): x_ref[2 * q + r] for q in (0, 1) for r in (0, 1)},
                     Cin, pscr_ref)
        y1 = conv3x3_relu(Cin, w1_ref, b1_ref, pscr_ref, col_ref, masks)

        # Conv1 output is materialized as a value before the shared scratches are reused
        # for conv2 (required for correctness of the scratch reuse).
        h1 = {(q, r): y1[:, (2 * q + r) * MhB:(2 * q + r + 1) * MhB]
              for q in (0, 1) for r in (0, 1)}
        stage_planes(h1, Cout, pscr_ref)
        y2 = conv3x3_relu(Cout, w2_ref, b2_ref, pscr_ref, col_ref, masks)

        # MaxPool 2x2 stride 2 == elementwise max over the four parity planes; the result
        # is already in the lane-dense output layout (Cout, Nb*Hh*Wh).
        out_ref[...] = jnp.maximum(
            jnp.maximum(y2[:, 0 * MhB:1 * MhB], y2[:, 1 * MhB:2 * MhB]),
            jnp.maximum(y2[:, 2 * MhB:3 * MhB], y2[:, 3 * MhB:4 * MhB]))

    return kernel


def _vmem_budget_and_limit():
    """Generation-aware VMEM budget / scoped limit (128 MiB-class vs 64 MiB-class parts)."""
    try:
        info = pltpu.get_tpu_info()
        cap = (getattr(info, "vmem_capacity_bytes", None)
               or getattr(info, "vmem_size_bytes", None))
    except Exception:
        cap = None
    mib = 1024 * 1024
    if cap is None:
        return 24 * mib, 32 * mib            # safe everywhere
    if cap >= 120 * mib:                     # v5e / v6e (128 MiB VMEM)
        return 64 * mib, 96 * mib
    if cap >= 48 * mib:                      # v7x-class (64 MiB VMEM per TensorCore)
        return 28 * mib, 48 * mib
    return 20 * mib, 32 * mib


def _pick_block_batch(N, Hh, Wh, Cin, Cout, budget_bytes):
    """Largest per-step batch block with lane-dense (multiple-of-128) block dims that fits
    the VMEM budget; prefers step counts of 1 or an even number (2-TensorCore balance)."""
    Cmax = max(Cin, Cout)
    pad = _r128(Wh + 1)

    def lane_ok(nb):
        return (nb * Hh * Wh) % 128 == 0 or nb == N

    def vmem_bytes(nb):
        mh = _r128(nb * Hh * Wh)
        io = 2 * 4 * mh * (4 * _r8(Cin) + _r8(4) + _r8(Cout))                   # dbl-buffered x/masks/out
        scratch = 4 * (4 * _r8(Cmax) * (mh + 2 * pad) + _r8(9 * Cmax) * 4 * mh)
        live = 4 * mh * (8 * Cout + 9 * Cmax + 4 * Cmax + 32)                   # y1/y2, col value, fetches
        return io + scratch + live

    divisors = [nb for nb in range(1, N + 1) if N % nb == 0 and lane_ok(nb)]
    fits = [nb for nb in divisors if vmem_bytes(nb) <= budget_bytes]
    if not fits:
        return min(divisors)                 # nb == N is always a valid divisor

    def pref(nb):
        steps = N // nb
        return (steps == 1 or steps % 2 == 0, nb)

    return max(fits, key=pref)


def source_encoder_forward(x_nchw, w1, b1, w2, b2, *, block_batch=None):
    """Pallas forward of SourceEncoder. x_nchw: (N, Cin, H, W) -> (N, Cout, H//2, W//2)."""
    N, Cin, H, W = x_nchw.shape
    Cout = w1.shape[0]
    assert H % 2 == 0 and W % 2 == 0, "even spatial dims expected"
    # TODO(synk): odd H/W (PyTorch MaxPool2d floors away the trailing row/col) not handled.
    Hh, Wh = H // 2, W // 2
    pad = _r128(Wh + 1)

    budget, vmem_limit = _vmem_budget_and_limit()
    Nb = block_batch or _pick_block_batch(N, Hh, Wh, Cin, Cout, budget)
    assert N % Nb == 0
    MhB = Nb * Hh * Wh
    Mtot = N * Hh * Wh
    Cmax = max(Cin, Cout)

    # ---- lane-dense, parity-split HBM layouts (one XLA relayout pass in the wrapper) ----
    # x: (N, Cin, H, W) -> (4, Cin, N*Hh*Wh); plane s = 2*(yy%2) + (xx%2),
    # lane index m = b*Hh*Wh + (yy//2)*Wh + (xx//2).
    xs = x_nchw.astype(jnp.float32).reshape(N, Cin, Hh, 2, Wh, 2)
    xs = jnp.transpose(xs, (3, 5, 1, 0, 2, 4)).reshape(4, Cin, Mtot)

    # Boundary masks for zero 'same' padding; rows: top, bottom, left, right.
    lane = jnp.arange(Mtot, dtype=jnp.int32)
    jx = lane % Wh
    jy = (lane // Wh) % Hh
    masks = jnp.stack([jy != 0, jy != Hh - 1, jx != 0, jx != Wh - 1],
                      axis=0).astype(jnp.float32)

    # PyTorch conv weights (Cout, Cin, 3, 3) -> transposed im2col matrices (Cout, 9*Cin),
    # contraction order (ky, kx, cin) to match the col-scratch row order.
    w1r = jnp.transpose(w1, (0, 2, 3, 1)).reshape(Cout, 9 * Cin).astype(jnp.float32)
    w2r = jnp.transpose(w2, (0, 2, 3, 1)).reshape(Cout, 9 * Cout).astype(jnp.float32)
    b1r = b1.reshape(Cout, 1).astype(jnp.float32)
    b2r = b2.reshape(Cout, 1).astype(jnp.float32)

    kernel = _make_kernel(Nb, Hh, Wh, Cin, Cout, pad)

    out_flat = pl.pallas_call(
        kernel,
        out_shape=jax.ShapeDtypeStruct((Cout, Mtot), jnp.float32),
        grid=(N // Nb,),
        in_specs=[
            pl.BlockSpec((4, Cin, MhB), lambda n: (0, 0, n)),
            pl.BlockSpec((4, MhB), lambda n: (0, n)),
            pl.BlockSpec((Cout, 9 * Cin), lambda n: (0, 0)),
            pl.BlockSpec((Cout, 1), lambda n: (0, 0)),
            pl.BlockSpec((Cout, 9 * Cout), lambda n: (0, 0)),
            pl.BlockSpec((Cout, 1), lambda n: (0, 0)),
        ],
        out_specs=pl.BlockSpec((Cout, MhB), lambda n: (0, n)),
        scratch_shapes=[
            pltpu.VMEM((4, Cmax, MhB + 2 * pad), jnp.float32),   # lane-haloed plane scratch
            pltpu.VMEM((9 * Cmax, 4 * MhB), jnp.float32),        # transposed im2col scratch
        ],
        compiler_params=pltpu.CompilerParams(
            dimension_semantics=("parallel",),
            vmem_limit_bytes=vmem_limit,
        ),
    )(xs, masks, w1r, b1r, w2r, b2r)

    # (Cout, N*Hh*Wh) -> (N, Cout, Hh, Wh) to match the PyTorch output convention.
    return jnp.transpose(out_flat.reshape(Cout, N, Hh, Wh), (1, 0, 2, 3))


def reference_forward(x_nchw, w1, b1, w2, b2):
    """Pure-JAX reference matching nn.Conv2d(3, pad=1)+ReLU x2 + MaxPool2d(2, 2)."""
    x = jnp.transpose(x_nchw, (0, 2, 3, 1))
    dn = ("NHWC", "HWIO", "NHWC")
    y = jax.lax.conv_general_dilated(
        x, jnp.transpose(w1, (2, 3, 1, 0)), (1, 1), "SAME", dimension_numbers=dn) + b1
    y = jnp.maximum(y, 0.0)
    y = jax.lax.conv_general_dilated(
        y, jnp.transpose(w2, (2, 3, 1, 0)), (1, 1), "SAME", dimension_numbers=dn) + b2
    y = jnp.maximum(y, 0.0)
    y = jax.lax.reduce_window(y, -jnp.inf, jax.lax.max, (1, 2, 2, 1), (1, 2, 2, 1), "VALID")
    return jnp.transpose(y, (0, 3, 1, 2))


if __name__ == "__main__":
    # Small shapes: batch=2, in_channels=4, out_channels=8, spatial=16x16.
    N, Cin, Cout, H, W = 2, 4, 8, 16, 16

    key = jax.random.PRNGKey(0)
    kx, k1, k2, k3, k4 = jax.random.split(key, 5)
    x = jax.random.normal(kx, (N, Cin, H, W), dtype=jnp.float32)
    w1 = 0.2 * jax.random.normal(k1, (Cout, Cin, 3, 3), dtype=jnp.float32)
    b1 = 0.1 * jax.random.normal(k2, (Cout,), dtype=jnp.float32)
    w2 = 0.2 * jax.random.normal(k3, (Cout, Cout, 3, 3), dtype=jnp.float32)
    b2 = 0.1 * jax.random.normal(k4, (Cout,), dtype=jnp.float32)

    out = jax.block_until_ready(source_encoder_forward(x, w1, b1, w2, b2))
    ref = jax.block_until_ready(reference_forward(x, w1, b1, w2, b2))

    assert out.shape == (N, Cout, H // 2, W // 2), out.shape
    np.testing.assert_allclose(np.asarray(out), np.asarray(ref), rtol=1e-4, atol=1e-4)

    print("KERNEL_OK")
</pallas_src>

<mosaic_0001>
module attributes {stable_mosaic.version = 11 : i64} {
  func.func @kernel(%arg0: i32, %arg1: memref<4x4x128xf32, #tpu.memory_space<vmem>>, %arg2: memref<4x128xf32, #tpu.memory_space<vmem>>, %arg3: memref<8x36xf32, #tpu.memory_space<vmem>>, %arg4: memref<8x1xf32, #tpu.memory_space<vmem>>, %arg5: memref<8x72xf32, #tpu.memory_space<vmem>>, %arg6: memref<8x1xf32, #tpu.memory_space<vmem>>, %arg7: memref<8x128xf32, #tpu.memory_space<vmem>>, %arg8: memref<4x8x384xf32, #tpu.memory_space<vmem>>, %arg9: memref<72x512xf32, #tpu.memory_space<vmem>>) attributes {dimension_semantics = [#tpu.dimension_semantics<parallel>], iteration_bounds = array<i64: 1>, scalar_prefetch = 0 : i64, scratch_operands = 2 : i64, tpu.core_type = #tpu.core_type<tc>, window_params = [{transform_indices = @transform_0, window_bounds = array<i64: 4, 4, 128>}, {transform_indices = @transform_1, window_bounds = array<i64: 4, 128>}, {pipeline_mode = #tpu.pipeline_mode<synchronous>, transform_indices = @transform_2, window_bounds = array<i64: 8, 36>}, {pipeline_mode = #tpu.pipeline_mode<synchronous>, transform_indices = @transform_3, window_bounds = array<i64: 8, 1>}, {pipeline_mode = #tpu.pipeline_mode<synchronous>, transform_indices = @transform_4, window_bounds = array<i64: 8, 72>}, {pipeline_mode = #tpu.pipeline_mode<synchronous>, transform_indices = @transform_5, window_bounds = array<i64: 8, 1>}, {transform_indices = @transform_6, window_bounds = array<i64: 8, 128>}]} {
    %c0 = arith.constant 0 : index
    %c0_0 = arith.constant 0 : index
    %0 = vector.load %arg2[%c0, %c0_0] : memref<4x128xf32, #tpu.memory_space<vmem>>, vector<1x128xf32>
    %c1 = arith.constant 1 : index
    %c0_1 = arith.constant 0 : index
    %1 = vector.load %arg2[%c1, %c0_1] : memref<4x128xf32, #tpu.memory_space<vmem>>, vector<1x128xf32>
    %c2 = arith.constant 2 : index
    %c0_2 = arith.constant 0 : index
    %2 = vector.load %arg2[%c2, %c0_2] : memref<4x128xf32, #tpu.memory_space<vmem>>, vector<1x128xf32>
    %c3 = arith.constant 3 : index
    %c0_3 = arith.constant 0 : index
    %3 = vector.load %arg2[%c3, %c0_3] : memref<4x128xf32, #tpu.memory_space<vmem>>, vector<1x128xf32>
    %c0_4 = arith.constant 0 : index
    %c0_5 = arith.constant 0 : index
    %c0_6 = arith.constant 0 : index
    %4 = vector.load %arg1[%c0_4, %c0_5, %c0_6] : memref<4x4x128xf32, #tpu.memory_space<vmem>>, vector<1x4x128xf32>
    %5 = vector.shape_cast %4 : vector<1x4x128xf32> to vector<4x128xf32>
    %c1_7 = arith.constant 1 : index
    %c0_8 = arith.constant 0 : index
    %c0_9 = arith.constant 0 : index
    %6 = vector.load %arg1[%c1_7, %c0_8, %c0_9] : memref<4x4x128xf32, #tpu.memory_space<vmem>>, vector<1x4x128xf32>
    %7 = vector.shape_cast %6 : vector<1x4x128xf32> to vector<4x128xf32>
    %c2_10 = arith.constant 2 : index
    %c0_11 = arith.constant 0 : index
    %c0_12 = arith.constant 0 : index
    %8 = vector.load %arg1[%c2_10, %c0_11, %c0_12] : memref<4x4x128xf32, #tpu.memory_space<vmem>>, vector<1x4x128xf32>
    %9 = vector.shape_cast %8 : vector<1x4x128xf32> to vector<4x128xf32>
    %c3_13 = arith.constant 3 : index
    %c0_14 = arith.constant 0 : index
    %c0_15 = arith.constant 0 : index
    %10 = vector.load %arg1[%c3_13, %c0_14, %c0_15] : memref<4x4x128xf32, #tpu.memory_space<vmem>>, vector<1x4x128xf32>
    %11 = vector.shape_cast %10 : vector<1x4x128xf32> to vector<4x128xf32>
    %c0_16 = arith.constant 0 : index
    %c0_17 = arith.constant 0 : index
    %c128 = arith.constant 128 : index
    %12 = vector.load %arg8[%c0_16, %c0_17, %c128] : memref<4x8x384xf32, #tpu.memory_space<vmem>>, vector<1x4x128xf32>
    %13 = vector.shape_cast %12 : vector<1x4x128xf32> to vector<4x128xf32>
    %14 = vector.shape_cast %5 : vector<4x128xf32> to vector<1x4x128xf32>
    tpu.vector_store %arg8[%c0_16, %c0_17, %c128], %14 {strides = array<i32>} : memref<4x8x384xf32, #tpu.memory_space<vmem>>, vector<1x4x128xf32>,
    %c1_18 = arith.constant 1 : index
    %c0_19 = arith.constant 0 : index
    %c128_20 = arith.constant 128 : index
    %15 = vector.load %arg8[%c1_18, %c0_19, %c128_20] : memref<4x8x384xf32, #tpu.memory_space<vmem>>, vector<1x4x128xf32>
    %16 = vector.shape_cast %15 : vector<1x4x128xf32> to vector<4x128xf32>
    %17 = vector.shape_cast %7 : vector<4x128xf32> to vector<1x4x128xf32>
    tpu.vector_store %arg8[%c1_18, %c0_19, %c128_20], %17 {strides = array<i32>} : memref<4x8x384xf32, #tpu.memory_space<vmem>>, vector<1x4x128xf32>,
    %c2_21 = arith.constant 2 : index
    %c0_22 = arith.constant 0 : index
    %c128_23 = arith.constant 128 : index
    %18 = vector.load %arg8[%c2_21, %c0_22, %c128_23] : memref<4x8x384xf32, #tpu.memory_space<vmem>>, vector<1x4x128xf32>
    %19 = vector.shape_cast %18 : vector<1x4x128xf32> to vector<4x128xf32>
    %20 = vector.shape_cast %9 : vector<4x128xf32> to vector<1x4x128xf32>
    tpu.vector_store %arg8[%c2_21, %c0_22, %c128_23], %20 {strides = array<i32>} : memref<4x8x384xf32, #tpu.memory_space<vmem>>, vector<1x4x128xf32>,
    %c3_24 = arith.constant 3 : index
    %c0_25 = arith.constant 0 : index
    %c128_26 = arith.constant 128 : index
    %21 = vector.load %arg8[%c3_24, %c0_25, %c128_26] : memref<4x8x384xf32, #tpu.memory_space<vmem>>, vector<1x4x128xf32>
    %22 = vector.shape_cast %21 : vector<1x4x128xf32> to vector<4x128xf32>
    %23 = vector.shape_cast %11 : vector<4x128xf32> to vector<1x4x128xf32>
    tpu.vector_store %arg8[%c3_24, %c0_25, %c128_26], %23 {strides = array<i32>} : memref<4x8x384xf32, #tpu.memory_space<vmem>>, vector<1x4x128xf32>,
    %c3_27 = arith.constant 3 : index
    %c0_28 = arith.constant 0 : index
    %c119 = arith.constant 119 : index
    %24 = vector.load %arg8[%c3_27, %c0_28, %c119] : memref<4x8x384xf32, #tpu.memory_space<vmem>>, vector<1x4x128xf32>
    %25 = vector.shape_cast %24 : vector<1x4x128xf32> to vector<4x128xf32>
    %26 = arith.mulf %0, %2 : vector<1x128xf32>
    %cst = arith.constant 5.000000e-01 : f32
    %27 = vector.broadcast %cst : f32 to vector<1x128xf32>
    %28 = arith.cmpf ogt, %26, %27 : vector<1x128xf32>
    %cst_29 = arith.constant 0.000000e+00 : f32
    %29 = vector.shape_cast %28 : vector<1x128xi1> to vector<1x128xi1>
    %30 = vector.broadcast %29 : vector<1x128xi1> to vector<4x128xi1>
    %31 = vector.broadcast %cst_29 : f32 to vector<4x128xf32>
    %32 = arith.select %30, %25, %31 : vector<4x128xi1>, vector<4x128xf32>
    %c0_30 = arith.constant 0 : index
    %c0_31 = arith.constant 0 : index
    %33 = vector.load %arg9[%c0_30, %c0_31] : memref<72x512xf32, #tpu.memory_space<vmem>>, vector<4x128xf32>
    tpu.vector_store %arg9[%c0_30, %c0_31], %32 {strides = array<i32>} : memref<72x512xf32, #tpu.memory_space<vmem>>, vector<4x128xf32>,
    %c2_32 = arith.constant 2 : index
    %c0_33 = arith.constant 0 : index
    %c120 = arith.constant 120 : index
    %34 = vector.load %arg8[%c2_32, %c0_33, %c120] : memref<4x8x384xf32, #tpu.memory_space<vmem>>, vector<1x4x128xf32>
    %35 = vector.shape_cast %34 : vector<1x4x128xf32> to vector<4x128xf32>
    %cst_34 = arith.constant 5.000000e-01 : f32
    %36 = vector.broadcast %cst_34 : f32 to vector<1x128xf32>
    %37 = arith.cmpf ogt, %0, %36 : vector<1x128xf32>
    %cst_35 = arith.constant 0.000000e+00 : f32
    %38 = vector.shape_cast %37 : vector<1x128xi1> to vector<1x128xi1>
    %39 = vector.broadcast %38 : vector<1x128xi1> to vector<4x128xi1>
    %40 = vector.broadcast %cst_35 : f32 to vector<4x128xf32>
    %41 = arith.select %39, %35, %40 : vector<4x128xi1>, vector<4x128xf32>
    %c4 = arith.constant 4 : index
    %c0_36 = arith.constant 0 : index
    %42 = vector.load %arg9[%c4, %c0_36] : memref<72x512xf32, #tpu.memory_space<vmem>>, vector<4x128xf32>
    tpu.vector_store %arg9[%c4, %c0_36], %41 {strides = array<i32>} : memref<72x512xf32, #tpu.memory_space<vmem>>, vector<4x128xf32>,
    %c3_37 = arith.constant 3 : index
    %c0_38 = arith.constant 0 : index
    %c120_39 = arith.constant 120 : index
    %43 = vector.load %arg8[%c3_37, %c0_38, %c120_39] : memref<4x8x384xf32, #tpu.memory_space<vmem>>, vector<1x4x128xf32>
    %44 = vector.shape_cast %43 : vector<1x4x128xf32> to vector<4x128xf32>
    %cst_40 = arith.constant 5.000000e-01 : f32
    %45 = vector.broadcast %cst_40 : f32 to vector<1x128xf32>
    %46 = arith.cmpf ogt, %0, %45 : vector<1x128xf32>
    %cst_41 = arith.constant 0.000000e+00 : f32
    %47 = vector.shape_cast %46 : vector<1x128xi1> to vector<1x128xi1>
    %48 = vector.broadcast %47 : vector<1x128xi1> to vector<4x128xi1>
    %49 = vector.broadcast %cst_41 : f32 to vector<4x128xf32>
    %50 = arith.select %48, %44, %49 : vector<4x128xi1>, vector<4x128xf32>
    %c8 = arith.constant 8 : index
    %c0_42 = arith.constant 0 : index
    %51 = vector.load %arg9[%c8, %c0_42] : memref<72x512xf32, #tpu.memory_space<vmem>>, vector<4x128xf32>
    tpu.vector_store %arg9[%c8, %c0_42], %50 {strides = array<i32>} : memref<72x512xf32, #tpu.memory_space<vmem>>, vector<4x128xf32>,
    %c1_43 = arith.constant 1 : index
    %c0_44 = arith.constant 0 : index
    %c127 = arith.constant 127 : index
    %52 = vector.load %arg8[%c1_43, %c0_44, %c127] : memref<4x8x384xf32, #tpu.memory_space<vmem>>, vector<1x4x128xf32>
    %53 = vector.shape_cast %52 : vector<1x4x128xf32> to vector<4x128xf32>
    %cst_45 = arith.constant 5.000000e-01 : f32
    %54 = vector.broadcast %cst_45 : f32 to vector<1x128xf32>
    %55 = arith.cmpf ogt, %2, %54 : vector<1x128xf32>
    %cst_46 = arith.constant 0.000000e+00 : f32
    %56 = vector.shape_cast %55 : vector<1x128xi1> to vector<1x128xi1>
    %57 = vector.broadcast %56 : vector<1x128xi1> to vector<4x128xi1>
    %58 = vector.broadcast %cst_46 : f32 to vector<4x128xf32>
    %59 = arith.select %57, %53, %58 : vector<4x128xi1>, vector<4x128xf32>
    %c12 = arith.constant 12 : index
    %c0_47 = arith.constant 0 : index
    %60 = vector.load %arg9[%c12, %c0_47] : memref<72x512xf32, #tpu.memory_space<vmem>>, vector<4x128xf32>
    tpu.vector_store %arg9[%c12, %c0_47], %59 {strides = array<i32>} : memref<72x512xf32, #tpu.memory_space<vmem>>, vector<4x128xf32>,
    %c0_48 = arith.constant 0 : index
    %c0_49 = arith.constant 0 : index
    %c128_50 = arith.constant 128 : index
    %61 = vector.load %arg8[%c0_48, %c0_49, %c128_50] : memref<4x8x384xf32, #tpu.memory_space<vmem>>, vector<1x4x128xf32>
    %62 = vector.shape_cast %61 : vector<1x4x128xf32> to vector<4x128xf32>
    %c16 = arith.constant 16 : index
    %c0_51 = arith.constant 0 : index
    %63 = vector.load %arg9[%c16, %c0_51] : memref<72x512xf32, #tpu.memory_space<vmem>>, vector<4x128xf32>
    tpu.vector_store %arg9[%c16, %c0_51], %62 {strides = array<i32>} : memref<72x512xf32, #tpu.memory_space<vmem>>, vector<4x128xf32>,
    %c1_52 = arith.constant 1 : index
    %c0_53 = arith.constant 0 : index
    %c128_54 = arith.constant 128 : index
    %64 = vector.load %arg8[%c1_52, %c0_53, %c128_54] : memref<4x8x384xf32, #tpu.memory_space<vmem>>, vector<1x4x128xf32>
    %65 = vector.shape_cast %64 : vector<1x4x128xf32> to vector<4x128xf32>
    %c20 = arith.constant 20 : index
    %c0_55 = arith.constant 0 : index
    %66 = vector.load %arg9[%c20, %c0_55] : memref<72x512xf32, #tpu.memory_space<vmem>>, vector<4x128xf32>
    tpu.vector_store %arg9[%c20, %c0_55], %65 {strides = array<i32>} : memref<72x512xf32, #tpu.memory_space<vmem>>, vector<4x128xf32>,
    %c3_56 = arith.constant 3 : index
    %c0_57 = arith.constant 0 : index
    %c127_58 = arith.constant 127 : index
    %67 = vector.load %arg8[%c3_56, %c0_57, %c127_58] : memref<4x8x384xf32, #tpu.memory_space<vmem>>, vector<1x4x128xf32>
    %68 = vector.shape_cast %67 : vector<1x4x128xf32> to vector<4x128xf32>
    %cst_59 = arith.constant 5.000000e-01 : f32
    %69 = vector.broadcast %cst_59 : f32 to vector<1x128xf32>
    %70 = arith.cmpf ogt, %2, %69 : vector<1x128xf32>
    %cst_60 = arith.constant 0.000000e+00 : f32
    %71 = vector.shape_cast %70 : vector<1x128xi1> to vector<1x128xi1>
    %72 = vector.broadcast %71 : vector<1x128xi1> to vector<4x128xi1>
    %73 = vector.broadcast %cst_60 : f32 to vector<4x128xf32>
    %74 = arith.select %72, %68, %73 : vector<4x128xi1>, vector<4x128xf32>
    %c24 = arith.constant 24 : index
    %c0_61 = arith.constant 0 : index
    %75 = vector.load %arg9[%c24, %c0_61] : memref<72x512xf32, #tpu.memory_space<vmem>>, vector<4x128xf32>
    tpu.vector_store %arg9[%c24, %c0_61], %74 {strides = array<i32>} : memref<72x512xf32, #tpu.memory_space<vmem>>, vector<4x128xf32>,
    %c2_62 = arith.constant 2 : index
    %c0_63 = arith.constant 0 : index
    %c128_64 = arith.constant 128 : index
    %76 = vector.load %arg8[%c2_62, %c0_63, %c128_64] : memref<4x8x384xf32, #tpu.memory_space<vmem>>, vector<1x4x128xf32>
    %77 = vector.shape_cast %76 : vector<1x4x128xf32> to vector<4x128xf32>
    %c28 = arith.constant 28 : index
    %c0_65 = arith.constant 0 : index
    %78 = vector.load %arg9[%c28, %c0_65] : memref<72x512xf32, #tpu.memory_space<vmem>>, vector<4x128xf32>
    tpu.vector_store %arg9[%c28, %c0_65], %77 {strides = array<i32>} : memref<72x512xf32, #tpu.memory_space<vmem>>, vector<4x128xf32>,
    %c3_66 = arith.constant 3 : index
    %c0_67 = arith.constant 0 : index
    %c128_68 = arith.constant 128 : index
    %79 = vector.load %arg8[%c3_66, %c0_67, %c128_68] : memref<4x8x384xf32, #tpu.memory_space<vmem>>, vector<1x4x128xf32>
    %80 = vector.shape_cast %79 : vector<1x4x128xf32> to vector<4x128xf32>
    %c32 = arith.constant 32 : index
    %c0_69 = arith.constant 0 : index
    %81 = vector.load %arg9[%c32, %c0_69] : memref<72x512xf32, #tpu.memory_space<vmem>>, vector<4x128xf32>
    tpu.vector_store %arg9[%c32, %c0_69], %80 {strides = array<i32>} : memref<72x512xf32, #tpu.memory_space<vmem>>, vector<4x128xf32>,
    %c0_70 = arith.constant 0 : index
    %c128_71 = arith.constant 128 : index
    %82 = vector.load %arg9[%c0_70, %c128_71] : memref<72x512xf32, #tpu.memory_space<vmem>>, vector<4x128xf32>
    tpu.vector_store %arg9[%c0_70, %c128_71], %41 {strides = array<i32>} : memref<72x512xf32, #tpu.memory_space<vmem>>, vector<4x128xf32>,
    %c4_72 = arith.constant 4 : index
    %c128_73 = arith.constant 128 : index
    %83 = vector.load %arg9[%c4_72, %c128_73] : memref<72x512xf32, #tpu.memory_space<vmem>>, vector<4x128xf32>
    tpu.vector_store %arg9[%c4_72, %c128_73], %50 {strides = array<i32>} : memref<72x512xf32, #tpu.memory_space<vmem>>, vector<4x128xf32>,
    %c2_74 = arith.constant 2 : index
    %c0_75 = arith.constant 0 : index
    %c121 = arith.constant 121 : index
    %84 = vector.load %arg8[%c2_74, %c0_75, %c121] : memref<4x8x384xf32, #tpu.memory_space<vmem>>, vector<1x4x128xf32>
    %85 = vector.shape_cast %84 : vector<1x4x128xf32> to vector<4x128xf32>
    %86 = arith.mulf %0, %3 : vector<1x128xf32>
    %cst_76 = arith.constant 5.000000e-01 : f32
    %87 = vector.broadcast %cst_76 : f32 to vector<1x128xf32>
    %88 = arith.cmpf ogt, %86, %87 : vector<1x128xf32>
    %cst_77 = arith.constant 0.000000e+00 : f32
    %89 = vector.shape_cast %88 : vector<1x128xi1> to vector<1x128xi1>
    %90 = vector.broadcast %89 : vector<1x128xi1> to vector<4x128xi1>
    %91 = vector.broadcast %cst_77 : f32 to vector<4x128xf32>
    %92 = arith.select %90, %85, %91 : vector<4x128xi1>, vector<4x128xf32>
    %c8_78 = arith.constant 8 : index
    %c128_79 = arith.constant 128 : index
    %93 = vector.load %arg9[%c8_78, %c128_79] : memref<72x512xf32, #tpu.memory_space<vmem>>, vector<4x128xf32>
    tpu.vector_store %arg9[%c8_78, %c128_79], %92 {strides = array<i32>} : memref<72x512xf32, #tpu.memory_space<vmem>>, vector<4x128xf32>,
    %c12_80 = arith.constant 12 : index
    %c128_81 = arith.constant 128 : index
    %94 = vector.load %arg9[%c12_80, %c128_81] : memref<72x512xf32, #tpu.memory_space<vmem>>, vector<4x128xf32>
    tpu.vector_store %arg9[%c12_80, %c128_81], %62 {strides = array<i32>} : memref<72x512xf32, #tpu.memory_space<vmem>>, vector<4x128xf32>,
    %c16_82 = arith.constant 16 : index
    %c128_83 = arith.constant 128 : index
    %95 = vector.load %arg9[%c16_82, %c128_83] : memref<72x512xf32, #tpu.memory_space<vmem>>, vector<4x128xf32>
    tpu.vector_store %arg9[%c16_82, %c128_83], %65 {strides = array<i32>} : memref<72x512xf32, #tpu.memory_space<vmem>>, vector<4x128xf32>,
    %c0_84 = arith.constant 0 : index
    %c0_85 = arith.constant 0 : index
    %c129 = arith.constant 129 : index
    %96 = vector.load %arg8[%c0_84, %c0_85, %c129] : memref<4x8x384xf32, #tpu.memory_space<vmem>>, vector<1x4x128xf32>
    %97 = vector.shape_cast %96 : vector<1x4x128xf32> to vector<4x128xf32>
    %cst_86 = arith.constant 5.000000e-01 : f32
    %98 = vector.broadcast %cst_86 : f32 to vector<1x128xf32>
    %99 = arith.cmpf ogt, %3, %98 : vector<1x128xf32>
    %cst_87 = arith.constant 0.000000e+00 : f32
    %100 = vector.shape_cast %99 : vector<1x128xi1> to vector<1x128xi1>
    %101 = vector.broadcast %100 : vector<1x128xi1> to vector<4x128xi1>
    %102 = vector.broadcast %cst_87 : f32 to vector<4x128xf32>
    %103 = arith.select %101, %97, %102 : vector<4x128xi1>, vector<4x128xf32>
    %c20_88 = arith.constant 20 : index
    %c128_89 = arith.constant 128 : index
    %104 = vector.load %arg9[%c20_88, %c128_89] : memref<72x512xf32, #tpu.memory_space<vmem>>, vector<4x128xf32>
    tpu.vector_store %arg9[%c20_88, %c128_89], %103 {strides = array<i32>} : memref<72x512xf32, #tpu.memory_space<vmem>>, vector<4x128xf32>,
    %c24_90 = arith.constant 24 : index
    %c128_91 = arith.constant 128 : index
    %105 = vector.load %arg9[%c24_90, %c128_91] : memref<72x512xf32, #tpu.memory_space<vmem>>, vector<4x128xf32>
    tpu.vector_store %arg9[%c24_90, %c128_91], %77 {strides = array<i32>} : memref<72x512xf32, #tpu.memory_space<vmem>>, vector<4x128xf32>,
    %c28_92 = arith.constant 28 : index
    %c128_93 = arith.constant 128 : index
    %106 = vector.load %arg9[%c28_92, %c128_93] : memref<72x512xf32, #tpu.memory_space<vmem>>, vector<4x128xf32>
    tpu.vector_store %arg9[%c28_92, %c128_93], %80 {strides = array<i32>} : memref<72x512xf32, #tpu.memory_space<vmem>>, vector<4x128xf32>,
    %c2_94 = arith.constant 2 : index
    %c0_95 = arith.constant 0 : index
    %c129_96 = arith.constant 129 : index
    %107 = vector.load %arg8[%c2_94, %c0_95, %c129_96] : memref<4x8x384xf32, #tpu.memory_space<vmem>>, vector<1x4x128xf32>
    %108 = vector.shape_cast %107 : vector<1x4x128xf32> to vector<4x128xf32>
    %cst_97 = arith.constant 5.000000e-01 : f32
    %109 = vector.broadcast %cst_97 : f32 to vector<1x128xf32>
    %110 = arith.cmpf ogt, %3, %109 : vector<1x128xf32>
    %cst_98 = arith.constant 0.000000e+00 : f32
    %111 = vector.shape_cast %110 : vector<1x128xi1> to vector<1x128xi1>
    %112 = vector.broadcast %111 : vector<1x128xi1> to vector<4x128xi1>
    %113 = vector.broadcast %cst_98 : f32 to vector<4x128xf32>
    %114 = arith.select %112, %108, %113 : vector<4x128xi1>, vector<4x128xf32>
    %c32_99 = arith.constant 32 : index
    %c128_100 = arith.constant 128 : index
    %115 = vector.load %arg9[%c32_99, %c128_100] : memref<72x512xf32, #tpu.memory_space<vmem>>, vector<4x128xf32>
    tpu.vector_store %arg9[%c32_99, %c128_100], %114 {strides = array<i32>} : memref<72x512xf32, #tpu.memory_space<vmem>>, vector<4x128xf32>,
    %c0_101 = arith.constant 0 : index
    %c256 = arith.constant 256 : index
    %116 = vector.load %arg9[%c0_101, %c256] : memref<72x512xf32, #tpu.memory_space<vmem>>, vector<4x128xf32>
    tpu.vector_store %arg9[%c0_101, %c256], %59 {strides = array<i32>} : memref<72x512xf32, #tpu.memory_space<vmem>>, vector<4x128xf32>,
    %c4_102 = arith.constant 4 : index
    %c256_103 = arith.constant 256 : index
    %117 = vector.load %arg9[%c4_102, %c256_103] : memref<72x512xf32, #tpu.memory_space<vmem>>, vector<4x128xf32>
    tpu.vector_store %arg9[%c4_102, %c256_103], %62 {strides = array<i32>} : memref<72x512xf32, #tpu.memory_space<vmem>>, vector<4x128xf32>,
    %c8_104 = arith.constant 8 : index
    %c256_105 = arith.constant 256 : index
    %118 = vector.load %arg9[%c8_104, %c256_105] : memref<72x512xf32, #tpu.memory_space<vmem>>, vector<4x128xf32>
    tpu.vector_store %arg9[%c8_104, %c256_105], %65 {strides = array<i32>} : memref<72x512xf32, #tpu.memory_space<vmem>>, vector<4x128xf32>,
    %c12_106 = arith.constant 12 : index
    %c256_107 = arith.constant 256 : index
    %119 = vector.load %arg9[%c12_106, %c256_107] : memref<72x512xf32, #tpu.memory_space<vmem>>, vector<4x128xf32>
    tpu.vector_store %arg9[%c12_106, %c256_107], %74 {strides = array<i32>} : memref<72x512xf32, #tpu.memory_space<vmem>>, vector<4x128xf32>,
    %c16_108 = arith.constant 16 : index
    %c256_109 = arith.constant 256 : index
    %120 = vector.load %arg9[%c16_108, %c256_109] : memref<72x512xf32, #tpu.memory_space<vmem>>, vector<4x128xf32>
    tpu.vector_store %arg9[%c16_108, %c256_109], %77 {strides = array<i32>} : memref<72x512xf32, #tpu.memory_space<vmem>>, vector<4x128xf32>,
    %c20_110 = arith.constant 20 : index
    %c256_111 = arith.constant 256 : index
    %121 = vector.load %arg9[%c20_110, %c256_111] : memref<72x512xf32, #tpu.memory_space<vmem>>, vector<4x128xf32>
    tpu.vector_store %arg9[%c20_110, %c256_111], %80 {strides = array<i32>} : memref<72x512xf32, #tpu.memory_space<vmem>>, vector<4x128xf32>,
    %c1_112 = arith.constant 1 : index
    %c0_113 = arith.constant 0 : index
    %c135 = arith.constant 135 : index
    %122 = vector.load %arg8[%c1_112, %c0_113, %c135] : memref<4x8x384xf32, #tpu.memory_space<vmem>>, vector<1x4x128xf32>
    %123 = vector.shape_cast %122 : vector<1x4x128xf32> to vector<4x128xf32>
    %124 = arith.mulf %1, %2 : vector<1x128xf32>
    %cst_114 = arith.constant 5.000000e-01 : f32
    %125 = vector.broadcast %cst_114 : f32 to vector<1x128xf32>
    %126 = arith.cmpf ogt, %124, %125 : vector<1x128xf32>
    %cst_115 = arith.constant 0.000000e+00 : f32
    %127 = vector.shape_cast %126 : vector<1x128xi1> to vector<1x128xi1>
    %128 = vector.broadcast %127 : vector<1x128xi1> to vector<4x128xi1>
    %129 = vector.broadcast %cst_115 : f32 to vector<4x128xf32>
    %130 = arith.select %128, %123, %129 : vector<4x128xi1>, vector<4x128xf32>
    %c24_116 = arith.constant 24 : index
    %c256_117 = arith.constant 256 : index
    %131 = vector.load %arg9[%c24_116, %c256_117] : memref<72x512xf32, #tpu.memory_space<vmem>>, vector<4x128xf32>
    tpu.vector_store %arg9[%c24_116, %c256_117], %130 {strides = array<i32>} : memref<72x512xf32, #tpu.memory_space<vmem>>, vector<4x128xf32>,
    %c0_118 = arith.constant 0 : index
    %c0_119 = arith.constant 0 : index
    %c136 = arith.constant 136 : index
    %132 = vector.load %arg8[%c0_118, %c0_119, %c136] : memref<4x8x384xf32, #tpu.memory_space<vmem>>, vector<1x4x128xf32>
    %133 = vector.shape_cast %132 : vector<1x4x128xf32> to vector<4x128xf32>
    %cst_120 = arith.constant 5.000000e-01 : f32
    %134 = vector.broadcast %cst_120 : f32 to vector<1x128xf32>
    %135 = arith.cmpf ogt, %1, %134 : vector<1x128xf32>
    %cst_121 = arith.constant 0.000000e+00 : f32
    %136 = vector.shape_cast %135 : vector<1x128xi1> to vector<1x128xi1>
    %137 = vector.broadcast %136 : vector<1x128xi1> to vector<4x128xi1>
    %138 = vector.broadcast %cst_121 : f32 to vector<4x128xf32>
    %139 = arith.select %137, %133, %138 : vector<4x128xi1>, vector<4x128xf32>
    %c28_122 = arith.constant 28 : index
    %c256_123 = arith.constant 256 : index
    %140 = vector.load %arg9[%c28_122, %c256_123] : memref<72x512xf32, #tpu.memory_space<vmem>>, vector<4x128xf32>
    tpu.vector_store %arg9[%c28_122, %c256_123], %139 {strides = array<i32>} : memref<72x512xf32, #tpu.memory_space<vmem>>, vector<4x128xf32>,
    %c1_124 = arith.constant 1 : index
    %c0_125 = arith.constant 0 : index
    %c136_126 = arith.constant 136 : index
    %141 = vector.load %arg8[%c1_124, %c0_125, %c136_126] : memref<4x8x384xf32, #tpu.memory_space<vmem>>, vector<1x4x128xf32>
    %142 = vector.shape_cast %141 : vector<1x4x128xf32> to vector<4x128xf32>
    %cst_127 = arith.constant 5.000000e-01 : f32
    %143 = vector.broadcast %cst_127 : f32 to vector<1x128xf32>
    %144 = arith.cmpf ogt, %1, %143 : vector<1x128xf32>
    %cst_128 = arith.constant 0.000000e+00 : f32
    %145 = vector.shape_cast %144 : vector<1x128xi1> to vector<1x128xi1>
    %146 = vector.broadcast %145 : vector<1x128xi1> to vector<4x128xi1>
    %147 = vector.broadcast %cst_128 : f32 to vector<4x128xf32>
    %148 = arith.select %146, %142, %147 : vector<4x128xi1>, vector<4x128xf32>
    %c32_129 = arith.constant 32 : index
    %c256_130 = arith.constant 256 : index
    %149 = vector.load %arg9[%c32_129, %c256_130] : memref<72x512xf32, #tpu.memory_space<vmem>>, vector<4x128xf32>
    tpu.vector_store %arg9[%c32_129, %c256_130], %148 {strides = array<i32>} : memref<72x512xf32, #tpu.memory_space<vmem>>, vector<4x128xf32>,
    %c0_131 = arith.constant 0 : index
    %c384 = arith.constant 384 : index
    %150 = vector.load %arg9[%c0_131, %c384] : memref<72x512xf32, #tpu.memory_space<vmem>>, vector<4x128xf32>
    tpu.vector_store %arg9[%c0_131, %c384], %62 {strides = array<i32>} : memref<72x512xf32, #tpu.memory_space<vmem>>, vector<4x128xf32>,
    %c4_132 = arith.constant 4 : index
    %c384_133 = arith.constant 384 : index
    %151 = vector.load %arg9[%c4_132, %c384_133] : memref<72x512xf32, #tpu.memory_space<vmem>>, vector<4x128xf32>
    tpu.vector_store %arg9[%c4_132, %c384_133], %65 {strides = array<i32>} : memref<72x512xf32, #tpu.memory_space<vmem>>, vector<4x128xf32>,
    %c8_134 = arith.constant 8 : index
    %c384_135 = arith.constant 384 : index
    %152 = vector.load %arg9[%c8_134, %c384_135] : memref<72x512xf32, #tpu.memory_space<vmem>>, vector<4x128xf32>
    tpu.vector_store %arg9[%c8_134, %c384_135], %103 {strides = array<i32>} : memref<72x512xf32, #tpu.memory_space<vmem>>, vector<4x128xf32>,
    %c12_136 = arith.constant 12 : index
    %c384_137 = arith.constant 384 : index
    %153 = vector.load %arg9[%c12_136, %c384_137] : memref<72x512xf32, #tpu.memory_space<vmem>>, vector<4x128xf32>
    tpu.vector_store %arg9[%c12_136, %c384_137], %77 {strides = array<i32>} : memref<72x512xf32, #tpu.memory_space<vmem>>, vector<4x128xf32>,
    %c16_138 = arith.constant 16 : index
    %c384_139 = arith.constant 384 : index
    %154 = vector.load %arg9[%c16_138, %c384_139] : memref<72x512xf32, #tpu.memory_space<vmem>>, vector<4x128xf32>
    tpu.vector_store %arg9[%c16_138, %c384_139], %80 {strides = array<i32>} : memref<72x512xf32, #tpu.memory_space<vmem>>, vector<4x128xf32>,
    %c20_140 = arith.constant 20 : index
    %c384_141 = arith.constant 384 : index
    %155 = vector.load %arg9[%c20_140, %c384_141] : memref<72x512xf32, #tpu.memory_space<vmem>>, vector<4x128xf32>
    tpu.vector_store %arg9[%c20_140, %c384_141], %114 {strides = array<i32>} : memref<72x512xf32, #tpu.memory_space<vmem>>, vector<4x128xf32>,
    %c24_142 = arith.constant 24 : index
    %c384_143 = arith.constant 384 : index
    %156 = vector.load %arg9[%c24_142, %c384_143] : memref<72x512xf32, #tpu.memory_space<vmem>>, vector<4x128xf32>
    tpu.vector_store %arg9[%c24_142, %c384_143], %139 {strides = array<i32>} : memref<72x512xf32, #tpu.memory_space<vmem>>, vector<4x128xf32>,
    %c28_144 = arith.constant 28 : index
    %c384_145 = arith.constant 384 : index
    %157 = vector.load %arg9[%c28_144, %c384_145] : memref<72x512xf32, #tpu.memory_space<vmem>>, vector<4x128xf32>
    tpu.vector_store %arg9[%c28_144, %c384_145], %148 {strides = array<i32>} : memref<72x512xf32, #tpu.memory_space<vmem>>, vector<4x128xf32>,
    %c0_146 = arith.constant 0 : index
    %c0_147 = arith.constant 0 : index
    %c137 = arith.constant 137 : index
    %158 = vector.load %arg8[%c0_146, %c0_147, %c137] : memref<4x8x384xf32, #tpu.memory_space<vmem>>, vector<1x4x128xf32>
    %159 = vector.shape_cast %158 : vector<1x4x128xf32> to vector<4x128xf32>
    %160 = arith.mulf %1, %3 : vector<1x128xf32>
    %cst_148 = arith.constant 5.000000e-01 : f32
    %161 = vector.broadcast %cst_148 : f32 to vector<1x128xf32>
    %162 = arith.cmpf ogt, %160, %161 : vector<1x128xf32>
    %cst_149 = arith.constant 0.000000e+00 : f32
    %163 = vector.shape_cast %162 : vector<1x128xi1> to vector<1x128xi1>
    %164 = vector.broadcast %163 : vector<1x128xi1> to vector<4x128xi1>
    %165 = vector.broadcast %cst_149 : f32 to vector<4x128xf32>
    %166 = arith.select %164, %159, %165 : vector<4x128xi1>, vector<4x128xf32>
    %c32_150 = arith.constant 32 : index
    %c384_151 = arith.constant 384 : index
    %167 = vector.load %arg9[%c32_150, %c384_151] : memref<72x512xf32, #tpu.memory_space<vmem>>, vector<4x128xf32>
    tpu.vector_store %arg9[%c32_150, %c384_151], %166 {strides = array<i32>} : memref<72x512xf32, #tpu.memory_space<vmem>>, vector<4x128xf32>,
    %c0_152 = arith.constant 0 : index
    %c0_153 = arith.constant 0 : index
    %168 = vector.load %arg3[%c0_152, %c0_153] : memref<8x36xf32, #tpu.memory_space<vmem>>, vector<8x36xf32>
    %c0_154 = arith.constant 0 : index
    %c0_155 = arith.constant 0 : index
    %169 = vector.load %arg9[%c0_154, %c0_155] : memref<72x512xf32, #tpu.memory_space<vmem>>, vector<36x512xf32>
    %cst_156 = arith.constant dense<0.000000e+00> : vector<8x512xf32>
    %170 = tpu.matmul %168, %169, %cst_156 {dimension_numbers = #tpu.dot_dimension_numbers<[1], [0], [0], [1], [0, 0, 1, 1], [], []>} : vector<8x36xf32>, vector<36x512xf32>, vector<8x512xf32> -> vector<8x512xf32>
    %c0_157 = arith.constant 0 : index
    %c0_158 = arith.constant 0 : index
    %171 = vector.load %arg4[%c0_157, %c0_158] : memref<8x1xf32, #tpu.memory_space<vmem>>, vector<8x1xf32>
    %172 = vector.broadcast %171 : vector<8x1xf32> to vector<8x512xf32>
    %173 = arith.addf %170, %172 : vector<8x512xf32>
    %cst_159 = arith.constant 0.000000e+00 : f32
    %174 = vector.broadcast %cst_159 : f32 to vector<8x512xf32>
    %175 = arith.maximumf %173, %174 : vector<8x512xf32>
    %176 = vector.extract_strided_slice %175 {offsets = [0, 0], sizes = [8, 128], strides = [1, 1]} : vector<8x512xf32> to vector<8x128xf32>
    %177 = vector.extract_strided_slice %175 {offsets = [0, 128], sizes = [8, 128], strides = [1, 1]} : vector<8x512xf32> to vector<8x128xf32>
    %178 = vector.extract_strided_slice %175 {offsets = [0, 256], sizes = [8, 128], strides = [1, 1]} : vector<8x512xf32> to vector<8x128xf32>
    %179 = vector.extract_strided_slice %175 {offsets = [0, 384], sizes = [8, 128], strides = [1, 1]} : vector<8x512xf32> to vector<8x128xf32>
    %c0_160 = arith.constant 0 : index
    %c0_161 = arith.constant 0 : index
    %c128_162 = arith.constant 128 : index
    %180 = vector.load %arg8[%c0_160, %c0_161, %c128_162] : memref<4x8x384xf32, #tpu.memory_space<vmem>>, vector<1x8x128xf32>
    %181 = vector.shape_cast %180 : vector<1x8x128xf32> to vector<8x128xf32>
    %182 = vector.shape_cast %176 : vector<8x128xf32> to vector<1x8x128xf32>
    tpu.vector_store %arg8[%c0_160, %c0_161, %c128_162], %182 {strides = array<i32>} : memref<4x8x384xf32, #tpu.memory_space<vmem>>, vector<1x8x128xf32>,
    %c1_163 = arith.constant 1 : index
    %c0_164 = arith.constant 0 : index
    %c128_165 = arith.constant 128 : index
    %183 = vector.load %arg8[%c1_163, %c0_164, %c128_165] : memref<4x8x384xf32, #tpu.memory_space<vmem>>, vector<1x8x128xf32>
    %184 = vector.shape_cast %183 : vector<1x8x128xf32> to vector<8x128xf32>
    %185 = vector.shape_cast %177 : vector<8x128xf32> to vector<1x8x128xf32>
    tpu.vector_store %arg8[%c1_163, %c0_164, %c128_165], %185 {strides = array<i32>} : memref<4x8x384xf32, #tpu.memory_space<vmem>>, vector<1x8x128xf32>,
    %c2_166 = arith.constant 2 : index
    %c0_167 = arith.constant 0 : index
    %c128_168 = arith.constant 128 : index
    %186 = vector.load %arg8[%c2_166, %c0_167, %c128_168] : memref<4x8x384xf32, #tpu.memory_space<vmem>>, vector<1x8x128xf32>
    %187 = vector.shape_cast %186 : vector<1x8x128xf32> to vector<8x128xf32>
    %188 = vector.shape_cast %178 : vector<8x128xf32> to vector<1x8x128xf32>
    tpu.vector_store %arg8[%c2_166, %c0_167, %c128_168], %188 {strides = array<i32>} : memref<4x8x384xf32, #tpu.memory_space<vmem>>, vector<1x8x128xf32>,
    %c3_169 = arith.constant 3 : index
    %c0_170 = arith.constant 0 : index
    %c128_171 = arith.constant 128 : index
    %189 = vector.load %arg8[%c3_169, %c0_170, %c128_171] : memref<4x8x384xf32, #tpu.memory_space<vmem>>, vector<1x8x128xf32>
    %190 = vector.shape_cast %189 : vector<1x8x128xf32> to vector<8x128xf32>
    %191 = vector.shape_cast %179 : vector<8x128xf32> to vector<1x8x128xf32>
    tpu.vector_store %arg8[%c3_169, %c0_170, %c128_171], %191 {strides = array<i32>} : memref<4x8x384xf32, #tpu.memory_space<vmem>>, vector<1x8x128xf32>,
    %c3_172 = arith.constant 3 : index
    %c0_173 = arith.constant 0 : index
    %c119_174 = arith.constant 119 : index
    %192 = vector.load %arg8[%c3_172, %c0_173, %c119_174] : memref<4x8x384xf32, #tpu.memory_space<vmem>>, vector<1x8x128xf32>
    %193 = vector.shape_cast %192 : vector<1x8x128xf32> to vector<8x128xf32>
    %194 = arith.mulf %0, %2 : vector<1x128xf32>
    %cst_175 = arith.constant 5.000000e-01 : f32
    %195 = vector.broadcast %cst_175 : f32 to vector<1x128xf32>
    %196 = arith.cmpf ogt, %194, %195 : vector<1x128xf32>
    %cst_176 = arith.constant 0.000000e+00 : f32
    %197 = vector.shape_cast %196 : vector<1x128xi1> to vector<1x128xi1>
    %198 = vector.broadcast %197 : vector<1x128xi1> to vector<8x128xi1>
    %199 = vector.broadcast %cst_176 : f32 to vector<8x128xf32>
    %200 = arith.select %198, %193, %199 : vector<8x128xi1>, vector<8x128xf32>
    %c0_177 = arith.constant 0 : index
    %c0_178 = arith.constant 0 : index
    %201 = vector.load %arg9[%c0_177, %c0_178] : memref<72x512xf32, #tpu.memory_space<vmem>>, vector<8x128xf32>
    tpu.vector_store %arg9[%c0_177, %c0_178], %200 {strides = array<i32>} : memref<72x512xf32, #tpu.memory_space<vmem>>, vector<8x128xf32>,
    %c2_179 = arith.constant 2 : index
    %c0_180 = arith.constant 0 : index
    %c120_181 = arith.constant 120 : index
    %202 = vector.load %arg8[%c2_179, %c0_180, %c120_181] : memref<4x8x384xf32, #tpu.memory_space<vmem>>, vector<1x8x128xf32>
    %203 = vector.shape_cast %202 : vector<1x8x128xf32> to vector<8x128xf32>
    %cst_182 = arith.constant 5.000000e-01 : f32
    %204 = vector.broadcast %cst_182 : f32 to vector<1x128xf32>
    %205 = arith.cmpf ogt, %0, %204 : vector<1x128xf32>
    %cst_183 = arith.constant 0.000000e+00 : f32
    %206 = vector.shape_cast %205 : vector<1x128xi1> to vector<1x128xi1>
    %207 = vector.broadcast %206 : vector<1x128xi1> to vector<8x128xi1>
    %208 = vector.broadcast %cst_183 : f32 to vector<8x128xf32>
    %209 = arith.select %207, %203, %208 : vector<8x128xi1>, vector<8x128xf32>
    %c8_184 = arith.constant 8 : index
    %c0_185 = arith.constant 0 : index
    %210 = vector.load %arg9[%c8_184, %c0_185] : memref<72x512xf32, #tpu.memory_space<vmem>>, vector<8x128xf32>
    tpu.vector_store %arg9[%c8_184, %c0_185], %209 {strides = array<i32>} : memref<72x512xf32, #tpu.memory_space<vmem>>, vector<8x128xf32>,
    %c3_186 = arith.constant 3 : index
    %c0_187 = arith.constant 0 : index
    %c120_188 = arith.constant 120 : index
    %211 = vector.load %arg8[%c3_186, %c0_187, %c120_188] : memref<4x8x384xf32, #tpu.memory_space<vmem>>, vector<1x8x128xf32>
    %212 = vector.shape_cast %211 : vector<1x8x128xf32> to vector<8x128xf32>
    %cst_189 = arith.constant 5.000000e-01 : f32
    %213 = vector.broadcast %cst_189 : f32 to vector<1x128xf32>
    %214 = arith.cmpf ogt, %0, %213 : vector<1x128xf32>
    %cst_190 = arith.constant 0.000000e+00 : f32
    %215 = vector.shape_cast %214 : vector<1x128xi1> to vector<1x128xi1>
    %216 = vector.broadcast %215 : vector<1x128xi1> to vector<8x128xi1>
    %217 = vector.broadcast %cst_190 : f32 to vector<8x128xf32>
    %218 = arith.select %216, %212, %217 : vector<8x128xi1>, vector<8x128xf32>
    %c16_191 = arith.constant 16 : index
    %c0_192 = arith.constant 0 : index
    %219 = vector.load %arg9[%c16_191, %c0_192] : memref<72x512xf32, #tpu.memory_space<vmem>>, vector<8x128xf32>
    tpu.vector_store %arg9[%c16_191, %c0_192], %218 {strides = array<i32>} : memref<72x512xf32, #tpu.memory_space<vmem>>, vector<8x128xf32>,
    %c1_193 = arith.constant 1 : index
    %c0_194 = arith.constant 0 : index
    %c127_195 = arith.constant 127 : index
    %220 = vector.load %arg8[%c1_193, %c0_194, %c127_195] : memref<4x8x384xf32, #tpu.memory_space<vmem>>, vector<1x8x128xf32>
    %221 = vector.shape_cast %220 : vector<1x8x128xf32> to vector<8x128xf32>
    %cst_196 = arith.constant 5.000000e-01 : f32
    %222 = vector.broadcast %cst_196 : f32 to vector<1x128xf32>
    %223 = arith.cmpf ogt, %2, %222 : vector<1x128xf32>
    %cst_197 = arith.constant 0.000000e+00 : f32
    %224 = vector.shape_cast %223 : vector<1x128xi1> to vector<1x128xi1>
    %225 = vector.broadcast %224 : vector<1x128xi1> to vector<8x128xi1>
    %226 = vector.broadcast %cst_197 : f32 to vector<8x128xf32>
    %227 = arith.select %225, %221, %226 : vector<8x128xi1>, vector<8x128xf32>
    %c24_198 = arith.constant 24 : index
    %c0_199 = arith.constant 0 : index
    %228 = vector.load %arg9[%c24_198, %c0_199] : memref<72x512xf32, #tpu.memory_space<vmem>>, vector<8x128xf32>
    tpu.vector_store %arg9[%c24_198, %c0_199], %227 {strides = array<i32>} : memref<72x512xf32, #tpu.memory_space<vmem>>, vector<8x128xf32>,
    %c0_200 = arith.constant 0 : index
    %c0_201 = arith.constant 0 : index
    %c128_202 = arith.constant 128 : index
    %229 = vector.load %arg8[%c0_200, %c0_201, %c128_202] : memref<4x8x384xf32, #tpu.memory_space<vmem>>, vector<1x8x128xf32>
    %230 = vector.shape_cast %229 : vector<1x8x128xf32> to vector<8x128xf32>
    %c32_203 = arith.constant 32 : index
    %c0_204 = arith.constant 0 : index
    %231 = vector.load %arg9[%c32_203, %c0_204] : memref<72x512xf32, #tpu.memory_space<vmem>>, vector<8x128xf32>
    tpu.vector_store %arg9[%c32_203, %c0_204], %230 {strides = array<i32>} : memref<72x512xf32, #tpu.memory_space<vmem>>, vector<8x128xf32>,
    %c1_205 = arith.constant 1 : index
    %c0_206 = arith.constant 0 : index
    %c128_207 = arith.constant 128 : index
    %232 = vector.load %arg8[%c1_205, %c0_206, %c128_207] : memref<4x8x384xf32, #tpu.memory_space<vmem>>, vector<1x8x128xf32>
    %233 = vector.shape_cast %232 : vector<1x8x128xf32> to vector<8x128xf32>
    %c40 = arith.constant 40 : index
    %c0_208 = arith.constant 0 : index
    %234 = vector.load %arg9[%c40, %c0_208] : memref<72x512xf32, #tpu.memory_space<vmem>>, vector<8x128xf32>
    tpu.vector_store %arg9[%c40, %c0_208], %233 {strides = array<i32>} : memref<72x512xf32, #tpu.memory_space<vmem>>, vector<8x128xf32>,
    %c3_209 = arith.constant 3 : index
    %c0_210 = arith.constant 0 : index
    %c127_211 = arith.constant 127 : index
    %235 = vector.load %arg8[%c3_209, %c0_210, %c127_211] : memref<4x8x384xf32, #tpu.memory_space<vmem>>, vector<1x8x128xf32>
    %236 = vector.shape_cast %235 : vector<1x8x128xf32> to vector<8x128xf32>
    %cst_212 = arith.constant 5.000000e-01 : f32
    %237 = vector.broadcast %cst_212 : f32 to vector<1x128xf32>
    %238 = arith.cmpf ogt, %2, %237 : vector<1x128xf32>
    %cst_213 = arith.constant 0.000000e+00 : f32
    %239 = vector.shape_cast %238 : vector<1x128xi1> to vector<1x128xi1>
    %240 = vector.broadcast %239 : vector<1x128xi1> to vector<8x128xi1>
    %241 = vector.broadcast %cst_213 : f32 to vector<8x128xf32>
    %242 = arith.select %240, %236, %241 : vector<8x128xi1>, vector<8x128xf32>
    %c48 = arith.constant 48 : index
    %c0_214 = arith.constant 0 : index
    %243 = vector.load %arg9[%c48, %c0_214] : memref<72x512xf32, #tpu.memory_space<vmem>>, vector<8x128xf32>
    tpu.vector_store %arg9[%c48, %c0_214], %242 {strides = array<i32>} : memref<72x512xf32, #tpu.memory_space<vmem>>, vector<8x128xf32>,
    %c2_215 = arith.constant 2 : index
    %c0_216 = arith.constant 0 : index
    %c128_217 = arith.constant 128 : index
    %244 = vector.load %arg8[%c2_215, %c0_216, %c128_217] : memref<4x8x384xf32, #tpu.memory_space<vmem>>, vector<1x8x128xf32>
    %245 = vector.shape_cast %244 : vector<1x8x128xf32> to vector<8x128xf32>
    %c56 = arith.constant 56 : index
    %c0_218 = arith.constant 0 : index
    %246 = vector.load %arg9[%c56, %c0_218] : memref<72x512xf32, #tpu.memory_space<vmem>>, vector<8x128xf32>
    tpu.vector_store %arg9[%c56, %c0_218], %245 {strides = array<i32>} : memref<72x512xf32, #tpu.memory_space<vmem>>, vector<8x128xf32>,
    %c3_219 = arith.constant 3 : index
    %c0_220 = arith.constant 0 : index
    %c128_221 = arith.constant 128 : index
    %247 = vector.load %arg8[%c3_219, %c0_220, %c128_221] : memref<4x8x384xf32, #tpu.memory_space<vmem>>, vector<1x8x128xf32>
    %248 = vector.shape_cast %247 : vector<1x8x128xf32> to vector<8x128xf32>
    %c64 = arith.constant 64 : index
    %c0_222 = arith.constant 0 : index
    %249 = vector.load %arg9[%c64, %c0_222] : memref<72x512xf32, #tpu.memory_space<vmem>>, vector<8x128xf32>
    tpu.vector_store %arg9[%c64, %c0_222], %248 {strides = array<i32>} : memref<72x512xf32, #tpu.memory_space<vmem>>, vector<8x128xf32>,
    %c0_223 = arith.constant 0 : index
    %c128_224 = arith.constant 128 : index
    %250 = vector.load %arg9[%c0_223, %c128_224] : memref<72x512xf32, #tpu.memory_space<vmem>>, vector<8x128xf32>
    tpu.vector_store %arg9[%c0_223, %c128_224], %209 {strides = array<i32>} : memref<72x512xf32, #tpu.memory_space<vmem>>, vector<8x128xf32>,
    %c8_225 = arith.constant 8 : index
    %c128_226 = arith.constant 128 : index
    %251 = vector.load %arg9[%c8_225, %c128_226] : memref<72x512xf32, #tpu.memory_space<vmem>>, vector<8x128xf32>
    tpu.vector_store %arg9[%c8_225, %c128_226], %218 {strides = array<i32>} : memref<72x512xf32, #tpu.memory_space<vmem>>, vector<8x128xf32>,
    %c2_227 = arith.constant 2 : index
    %c0_228 = arith.constant 0 : index
    %c121_229 = arith.constant 121 : index
    %252 = vector.load %arg8[%c2_227, %c0_228, %c121_229] : memref<4x8x384xf32, #tpu.memory_space<vmem>>, vector<1x8x128xf32>
    %253 = vector.shape_cast %252 : vector<1x8x128xf32> to vector<8x128xf32>
    %254 = arith.mulf %0, %3 : vector<1x128xf32>
    %cst_230 = arith.constant 5.000000e-01 : f32
    %255 = vector.broadcast %cst_230 : f32 to vector<1x128xf32>
    %256 = arith.cmpf ogt, %254, %255 : vector<1x128xf32>
    %cst_231 = arith.constant 0.000000e+00 : f32
    %257 = vector.shape_cast %256 : vector<1x128xi1> to vector<1x128xi1>
    %258 = vector.broadcast %257 : vector<1x128xi1> to vector<8x128xi1>
    %259 = vector.broadcast %cst_231 : f32 to vector<8x128xf32>
    %260 = arith.select %258, %253, %259 : vector<8x128xi1>, vector<8x128xf32>
    %c16_232 = arith.constant 16 : index
    %c128_233 = arith.constant 128 : index
    %261 = vector.load %arg9[%c16_232, %c128_233] : memref<72x512xf32, #tpu.memory_space<vmem>>, vector<8x128xf32>
    tpu.vector_store %arg9[%c16_232, %c128_233], %260 {strides = array<i32>} : memref<72x512xf32, #tpu.memory_space<vmem>>, vector<8x128xf32>,
    %c24_234 = arith.constant 24 : index
    %c128_235 = arith.constant 128 : index
    %262 = vector.load %arg9[%c24_234, %c128_235] : memref<72x512xf32, #tpu.memory_space<vmem>>, vector<8x128xf32>
    tpu.vector_store %arg9[%c24_234, %c128_235], %230 {strides = array<i32>} : memref<72x512xf32, #tpu.memory_space<vmem>>, vector<8x128xf32>,
    %c32_236 = arith.constant 32 : index
    %c128_237 = arith.constant 128 : index
    %263 = vector.load %arg9[%c32_236, %c128_237] : memref<72x512xf32, #tpu.memory_space<vmem>>, vector<8x128xf32>
    tpu.vector_store %arg9[%c32_236, %c128_237], %233 {strides = array<i32>} : memref<72x512xf32, #tpu.memory_space<vmem>>, vector<8x128xf32>,
    %c0_238 = arith.constant 0 : index
    %c0_239 = arith.constant 0 : index
    %c129_240 = arith.constant 129 : index
    %264 = vector.load %arg8[%c0_238, %c0_239, %c129_240] : memref<4x8x384xf32, #tpu.memory_space<vmem>>, vector<1x8x128xf32>
    %265 = vector.shape_cast %264 : vector<1x8x128xf32> to vector<8x128xf32>
    %cst_241 = arith.constant 5.000000e-01 : f32
    %266 = vector.broadcast %cst_241 : f32 to vector<1x128xf32>
    %267 = arith.cmpf ogt, %3, %266 : vector<1x128xf32>
    %cst_242 = arith.constant 0.000000e+00 : f32
    %268 = vector.shape_cast %267 : vector<1x128xi1> to vector<1x128xi1>
    %269 = vector.broadcast %268 : vector<1x128xi1> to vector<8x128xi1>
    %270 = vector.broadcast %cst_242 : f32 to vector<8x128xf32>
    %271 = arith.select %269, %265, %270 : vector<8x128xi1>, vector<8x128xf32>
    %c40_243 = arith.constant 40 : index
    %c128_244 = arith.constant 128 : index
    %272 = vector.load %arg9[%c40_243, %c128_244] : memref<72x512xf32, #tpu.memory_space<vmem>>, vector<8x128xf32>
    tpu.vector_store %arg9[%c40_243, %c128_244], %271 {strides = array<i32>} : memref<72x512xf32, #tpu.memory_space<vmem>>, vector<8x128xf32>,
    %c48_245 = arith.constant 48 : index
    %c128_246 = arith.constant 128 : index
    %273 = vector.load %arg9[%c48_245, %c128_246] : memref<72x512xf32, #tpu.memory_space<vmem>>, vector<8x128xf32>
    tpu.vector_store %arg9[%c48_245, %c128_246], %245 {strides = array<i32>} : memref<72x512xf32, #tpu.memory_space<vmem>>, vector<8x128xf32>,
    %c56_247 = arith.constant 56 : index
    %c128_248 = arith.constant 128 : index
    %274 = vector.load %arg9[%c56_247, %c128_248] : memref<72x512xf32, #tpu.memory_space<vmem>>, vector<8x128xf32>
    tpu.vector_store %arg9[%c56_247, %c128_248], %248 {strides = array<i32>} : memref<72x512xf32, #tpu.memory_space<vmem>>, vector<8x128xf32>,
    %c2_249 = arith.constant 2 : index
    %c0_250 = arith.constant 0 : index
    %c129_251 = arith.constant 129 : index
    %275 = vector.load %arg8[%c2_249, %c0_250, %c129_251] : memref<4x8x384xf32, #tpu.memory_space<vmem>>, vector<1x8x128xf32>
    %276 = vector.shape_cast %275 : vector<1x8x128xf32> to vector<8x128xf32>
    %cst_252 = arith.constant 5.000000e-01 : f32
    %277 = vector.broadcast %cst_252 : f32 to vector<1x128xf32>
    %278 = arith.cmpf ogt, %3, %277 : vector<1x128xf32>
    %cst_253 = arith.constant 0.000000e+00 : f32
    %279 = vector.shape_cast %278 : vector<1x128xi1> to vector<1x128xi1>
    %280 = vector.broadcast %279 : vector<1x128xi1> to vector<8x128xi1>
    %281 = vector.broadcast %cst_253 : f32 to vector<8x128xf32>
    %282 = arith.select %280, %276, %281 : vector<8x128xi1>, vector<8x128xf32>
    %c64_254 = arith.constant 64 : index
    %c128_255 = arith.constant 128 : index
    %283 = vector.load %arg9[%c64_254, %c128_255] : memref<72x512xf32, #tpu.memory_space<vmem>>, vector<8x128xf32>
    tpu.vector_store %arg9[%c64_254, %c128_255], %282 {strides = array<i32>} : memref<72x512xf32, #tpu.memory_space<vmem>>, vector<8x128xf32>,
    %c0_256 = arith.constant 0 : index
    %c256_257 = arith.constant 256 : index
    %284 = vector.load %arg9[%c0_256, %c256_257] : memref<72x512xf32, #tpu.memory_space<vmem>>, vector<8x128xf32>
    tpu.vector_store %arg9[%c0_256, %c256_257], %227 {strides = array<i32>} : memref<72x512xf32, #tpu.memory_space<vmem>>, vector<8x128xf32>,
    %c8_258 = arith.constant 8 : index
    %c256_259 = arith.constant 256 : index
    %285 = vector.load %arg9[%c8_258, %c256_259] : memref<72x512xf32, #tpu.memory_space<vmem>>, vector<8x128xf32>
    tpu.vector_store %arg9[%c8_258, %c256_259], %230 {strides = array<i32>} : memref<72x512xf32, #tpu.memory_space<vmem>>, vector<8x128xf32>,
    %c16_260 = arith.constant 16 : index
    %c256_261 = arith.constant 256 : index
    %286 = vector.load %arg9[%c16_260, %c256_261] : memref<72x512xf32, #tpu.memory_space<vmem>>, vector<8x128xf32>
    tpu.vector_store %arg9[%c16_260, %c256_261], %233 {strides = array<i32>} : memref<72x512xf32, #tpu.memory_space<vmem>>, vector<8x128xf32>,
    %c24_262 = arith.constant 24 : index
    %c256_263 = arith.constant 256 : index
    %287 = vector.load %arg9[%c24_262, %c256_263] : memref<72x512xf32, #tpu.memory_space<vmem>>, vector<8x128xf32>
    tpu.vector_store %arg9[%c24_262, %c256_263], %242 {strides = array<i32>} : memref<72x512xf32, #tpu.memory_space<vmem>>, vector<8x128xf32>,
    %c32_264 = arith.constant 32 : index
    %c256_265 = arith.constant 256 : index
    %288 = vector.load %arg9[%c32_264, %c256_265] : memref<72x512xf32, #tpu.memory_space<vmem>>, vector<8x128xf32>
    tpu.vector_store %arg9[%c32_264, %c256_265], %245 {strides = array<i32>} : memref<72x512xf32, #tpu.memory_space<vmem>>, vector<8x128xf32>,
    %c40_266 = arith.constant 40 : index
    %c256_267 = arith.constant 256 : index
    %289 = vector.load %arg9[%c40_266, %c256_267] : memref<72x512xf32, #tpu.memory_space<vmem>>, vector<8x128xf32>
    tpu.vector_store %arg9[%c40_266, %c256_267], %248 {strides = array<i32>} : memref<72x512xf32, #tpu.memory_space<vmem>>, vector<8x128xf32>,
    %c1_268 = arith.constant 1 : index
    %c0_269 = arith.constant 0 : index
    %c135_270 = arith.constant 135 : index
    %290 = vector.load %arg8[%c1_268, %c0_269, %c135_270] : memref<4x8x384xf32, #tpu.memory_space<vmem>>, vector<1x8x128xf32>
    %291 = vector.shape_cast %290 : vector<1x8x128xf32> to vector<8x128xf32>
    %292 = arith.mulf %1, %2 : vector<1x128xf32>
    %cst_271 = arith.constant 5.000000e-01 : f32
    %293 = vector.broadcast %cst_271 : f32 to vector<1x128xf32>
    %294 = arith.cmpf ogt, %292, %293 : vector<1x128xf32>
    %cst_272 = arith.constant 0.000000e+00 : f32
    %295 = vector.shape_cast %294 : vector<1x128xi1> to vector<1x128xi1>
    %296 = vector.broadcast %295 : vector<1x128xi1> to vector<8x128xi1>
    %297 = vector.broadcast %cst_272 : f32 to vector<8x128xf32>
    %298 = arith.select %296, %291, %297 : vector<8x128xi1>, vector<8x128xf32>
    %c48_273 = arith.constant 48 : index
    %c256_274 = arith.constant 256 : index
    %299 = vector.load %arg9[%c48_273, %c256_274] : memref<72x512xf32, #tpu.memory_space<vmem>>, vector<8x128xf32>
    tpu.vector_store %arg9[%c48_273, %c256_274], %298 {strides = array<i32>} : memref<72x512xf32, #tpu.memory_space<vmem>>, vector<8x128xf32>,
    %c0_275 = arith.constant 0 : index
    %c0_276 = arith.constant 0 : index
    %c136_277 = arith.constant 136 : index
    %300 = vector.load %arg8[%c0_275, %c0_276, %c136_277] : memref<4x8x384xf32, #tpu.memory_space<vmem>>, vector<1x8x128xf32>
    %301 = vector.shape_cast %300 : vector<1x8x128xf32> to vector<8x128xf32>
    %cst_278 = arith.constant 5.000000e-01 : f32
    %302 = vector.broadcast %cst_278 : f32 to vector<1x128xf32>
    %303 = arith.cmpf ogt, %1, %302 : vector<1x128xf32>
    %cst_279 = arith.constant 0.000000e+00 : f32
    %304 = vector.shape_cast %303 : vector<1x128xi1> to vector<1x128xi1>
    %305 = vector.broadcast %304 : vector<1x128xi1> to vector<8x128xi1>
    %306 = vector.broadcast %cst_279 : f32 to vector<8x128xf32>
    %307 = arith.select %305, %301, %306 : vector<8x128xi1>, vector<8x128xf32>
    %c56_280 = arith.constant 56 : index
    %c256_281 = arith.constant 256 : index
    %308 = vector.load %arg9[%c56_280, %c256_281] : memref<72x512xf32, #tpu.memory_space<vmem>>, vector<8x128xf32>
    tpu.vector_store %arg9[%c56_280, %c256_281], %307 {strides = array<i32>} : memref<72x512xf32, #tpu.memory_space<vmem>>, vector<8x128xf32>,
    %c1_282 = arith.constant 1 : index
    %c0_283 = arith.constant 0 : index
    %c136_284 = arith.constant 136 : index
    %309 = vector.load %arg8[%c1_282, %c0_283, %c136_284] : memref<4x8x384xf32, #tpu.memory_space<vmem>>, vector<1x8x128xf32>
    %310 = vector.shape_cast %309 : vector<1x8x128xf32> to vector<8x128xf32>
    %cst_285 = arith.constant 5.000000e-01 : f32
    %311 = vector.broadcast %cst_285 : f32 to vector<1x128xf32>
    %312 = arith.cmpf ogt, %1, %311 : vector<1x128xf32>
    %cst_286 = arith.constant 0.000000e+00 : f32
    %313 = vector.shape_cast %312 : vector<1x128xi1> to vector<1x128xi1>
    %314 = vector.broadcast %313 : vector<1x128xi1> to vector<8x128xi1>
    %315 = vector.broadcast %cst_286 : f32 to vector<8x128xf32>
    %316 = arith.select %314, %310, %315 : vector<8x128xi1>, vector<8x128xf32>
    %c64_287 = arith.constant 64 : index
    %c256_288 = arith.constant 256 : index
    %317 = vector.load %arg9[%c64_287, %c256_288] : memref<72x512xf32, #tpu.memory_space<vmem>>, vector<8x128xf32>
    tpu.vector_store %arg9[%c64_287, %c256_288], %316 {strides = array<i32>} : memref<72x512xf32, #tpu.memory_space<vmem>>, vector<8x128xf32>,
    %c0_289 = arith.constant 0 : index
    %c384_290 = arith.constant 384 : index
    %318 = vector.load %arg9[%c0_289, %c384_290] : memref<72x512xf32, #tpu.memory_space<vmem>>, vector<8x128xf32>
    tpu.vector_store %arg9[%c0_289, %c384_290], %230 {strides = array<i32>} : memref<72x512xf32, #tpu.memory_space<vmem>>, vector<8x128xf32>,
    %c8_291 = arith.constant 8 : index
    %c384_292 = arith.constant 384 : index
    %319 = vector.load %arg9[%c8_291, %c384_292] : memref<72x512xf32, #tpu.memory_space<vmem>>, vector<8x128xf32>
    tpu.vector_store %arg9[%c8_291, %c384_292], %233 {strides = array<i32>} : memref<72x512xf32, #tpu.memory_space<vmem>>, vector<8x128xf32>,
    %c16_293 = arith.constant 16 : index
    %c384_294 = arith.constant 384 : index
    %320 = vector.load %arg9[%c16_293, %c384_294] : memref<72x512xf32, #tpu.memory_space<vmem>>, vector<8x128xf32>
    tpu.vector_store %arg9[%c16_293, %c384_294], %271 {strides = array<i32>} : memref<72x512xf32, #tpu.memory_space<vmem>>, vector<8x128xf32>,
    %c24_295 = arith.constant 24 : index
    %c384_296 = arith.constant 384 : index
    %321 = vector.load %arg9[%c24_295, %c384_296] : memref<72x512xf32, #tpu.memory_space<vmem>>, vector<8x128xf32>
    tpu.vector_store %arg9[%c24_295, %c384_296], %245 {strides = array<i32>} : memref<72x512xf32, #tpu.memory_space<vmem>>, vector<8x128xf32>,
    %c32_297 = arith.constant 32 : index
    %c384_298 = arith.constant 384 : index
    %322 = vector.load %arg9[%c32_297, %c384_298] : memref<72x512xf32, #tpu.memory_space<vmem>>, vector<8x128xf32>
    tpu.vector_store %arg9[%c32_297, %c384_298], %248 {strides = array<i32>} : memref<72x512xf32, #tpu.memory_space<vmem>>, vector<8x128xf32>,
    %c40_299 = arith.constant 40 : index
    %c384_300 = arith.constant 384 : index
    %323 = vector.load %arg9[%c40_299, %c384_300] : memref<72x512xf32, #tpu.memory_space<vmem>>, vector<8x128xf32>
    tpu.vector_store %arg9[%c40_299, %c384_300], %282 {strides = array<i32>} : memref<72x512xf32, #tpu.memory_space<vmem>>, vector<8x128xf32>,
    %c48_301 = arith.constant 48 : index
    %c384_302 = arith.constant 384 : index
    %324 = vector.load %arg9[%c48_301, %c384_302] : memref<72x512xf32, #tpu.memory_space<vmem>>, vector<8x128xf32>
    tpu.vector_store %arg9[%c48_301, %c384_302], %307 {strides = array<i32>} : memref<72x512xf32, #tpu.memory_space<vmem>>, vector<8x128xf32>,
    %c56_303 = arith.constant 56 : index
    %c384_304 = arith.constant 384 : index
    %325 = vector.load %arg9[%c56_303, %c384_304] : memref<72x512xf32, #tpu.memory_space<vmem>>, vector<8x128xf32>
    tpu.vector_store %arg9[%c56_303, %c384_304], %316 {strides = array<i32>} : memref<72x512xf32, #tpu.memory_space<vmem>>, vector<8x128xf32>,
    %c0_305 = arith.constant 0 : index
    %c0_306 = arith.constant 0 : index
    %c137_307 = arith.constant 137 : index
    %326 = vector.load %arg8[%c0_305, %c0_306, %c137_307] : memref<4x8x384xf32, #tpu.memory_space<vmem>>, vector<1x8x128xf32>
    %327 = vector.shape_cast %326 : vector<1x8x128xf32> to vector<8x128xf32>
    %328 = arith.mulf %1, %3 : vector<1x128xf32>
    %cst_308 = arith.constant 5.000000e-01 : f32
    %329 = vector.broadcast %cst_308 : f32 to vector<1x128xf32>
    %330 = arith.cmpf ogt, %328, %329 : vector<1x128xf32>
    %cst_309 = arith.constant 0.000000e+00 : f32
    %331 = vector.shape_cast %330 : vector<1x128xi1> to vector<1x128xi1>
    %332 = vector.broadcast %331 : vector<1x128xi1> to vector<8x128xi1>
    %333 = vector.broadcast %cst_309 : f32 to vector<8x128xf32>
    %334 = arith.select %332, %327, %333 : vector<8x128xi1>, vector<8x128xf32>
    %c64_310 = arith.constant 64 : index
    %c384_311 = arith.constant 384 : index
    %335 = vector.load %arg9[%c64_310, %c384_311] : memref<72x512xf32, #tpu.memory_space<vmem>>, vector<8x128xf32>
    tpu.vector_store %arg9[%c64_310, %c384_311], %334 {strides = array<i32>} : memref<72x512xf32, #tpu.memory_space<vmem>>, vector<8x128xf32>,
    %c0_312 = arith.constant 0 : index
    %c0_313 = arith.constant 0 : index
    %336 = vector.load %arg5[%c0_312, %c0_313] : memref<8x72xf32, #tpu.memory_space<vmem>>, vector<8x72xf32>
    %c0_314 = arith.constant 0 : index
    %c0_315 = arith.constant 0 : index
    %337 = vector.load %arg9[%c0_314, %c0_315] : memref<72x512xf32, #tpu.memory_space<vmem>>, vector<72x512xf32>
    %cst_316 = arith.constant dense<0.000000e+00> : vector<8x512xf32>
    %338 = tpu.matmul %336, %337, %cst_316 {dimension_numbers = #tpu.dot_dimension_numbers<[1], [0], [0], [1], [0, 0, 1, 1], [], []>} : vector<8x72xf32>, vector<72x512xf32>, vector<8x512xf32> -> vector<8x512xf32>
    %c0_317 = arith.constant 0 : index
    %c0_318 = arith.constant 0 : index
    %339 = vector.load %arg6[%c0_317, %c0_318] : memref<8x1xf32, #tpu.memory_space<vmem>>, vector<8x1xf32>
    %340 = vector.broadcast %339 : vector<8x1xf32> to vector<8x512xf32>
    %341 = arith.addf %338, %340 : vector<8x512xf32>
    %cst_319 = arith.constant 0.000000e+00 : f32
    %342 = vector.broadcast %cst_319 : f32 to vector<8x512xf32>
    %343 = arith.maximumf %341, %342 : vector<8x512xf32>
    %344 = vector.extract_strided_slice %343 {offsets = [0, 0], sizes = [8, 128], strides = [1, 1]} : vector<8x512xf32> to vector<8x128xf32>
    %345 = vector.extract_strided_slice %343 {offsets = [0, 128], sizes = [8, 128], strides = [1, 1]} : vector<8x512xf32> to vector<8x128xf32>
    %346 = arith.maximumf %344, %345 : vector<8x128xf32>
    %347 = vector.extract_strided_slice %343 {offsets = [0, 256], sizes = [8, 128], strides = [1, 1]} : vector<8x512xf32> to vector<8x128xf32>
    %348 = vector.extract_strided_slice %343 {offsets = [0, 384], sizes = [8, 128], strides = [1, 1]} : vector<8x512xf32> to vector<8x128xf32>
    %349 = arith.maximumf %347, %348 : vector<8x128xf32>
    %350 = arith.maximumf %346, %349 : vector<8x128xf32>
    %c0_320 = arith.constant 0 : index
    %c0_321 = arith.constant 0 : index
    %351 = vector.load %arg7[%c0_320, %c0_321] : memref<8x128xf32, #tpu.memory_space<vmem>>, vector<8x128xf32>
    tpu.vector_store %arg7[%c0_320, %c0_321], %350 {strides = array<i32>} : memref<8x128xf32, #tpu.memory_space<vmem>>, vector<8x128xf32>,
    return
  }
  func.func @transform_0(%arg0: i32) -> (i32, i32, i32) {
    %c0_i32 = arith.constant 0 : i32
    %c0_i32_0 = arith.constant 0 : i32
    %c0_i32_1 = arith.constant 0 : i32
    return %c0_i32, %c0_i32_0, %arg0 : i32, i32, i32
  }
  func.func @transform_1(%arg0: i32) -> (i32, i32) {
    %c0_i32 = arith.constant 0 : i32
    %c0_i32_0 = arith.constant 0 : i32
    return %c0_i32, %arg0 : i32, i32
  }
  func.func @transform_2(%arg0: i32) -> (i32, i32) {
    %c0_i32 = arith.constant 0 : i32
    %c0_i32_0 = arith.constant 0 : i32
    %c0_i32_1 = arith.constant 0 : i32
    return %c0_i32, %c0_i32_0 : i32, i32
  }
  func.func @transform_3(%arg0: i32) -> (i32, i32) {
    %c0_i32 = arith.constant 0 : i32
    %c0_i32_0 = arith.constant 0 : i32
    %c0_i32_1 = arith.constant 0 : i32
    return %c0_i32, %c0_i32_0 : i32, i32
  }
  func.func @transform_4(%arg0: i32) -> (i32, i32) {
    %c0_i32 = arith.constant 0 : i32
    %c0_i32_0 = arith.constant 0 : i32
    %c0_i32_1 = arith.constant 0 : i32
    return %c0_i32, %c0_i32_0 : i32, i32
  }
  func.func @transform_5(%arg0: i32) -> (i32, i32) {
    %c0_i32 = arith.constant 0 : i32
    %c0_i32_0 = arith.constant 0 : i32
    %c0_i32_1 = arith.constant 0 : i32
    return %c0_i32, %c0_i32_0 : i32, i32
  }
  func.func @transform_6(%arg0: i32) -> (i32, i32) {
    %c0_i32 = arith.constant 0 : i32
    %c0_i32_0 = arith.constant 0 : i32
    return %c0_i32, %arg0 : i32, i32
  }
}

</mosaic_0001>

<llo_original>
// kernel: tpu_custom_call.1
$region0: #{tpu_custom_call.1}
  #allocation0 [shape = 'u32[]', space=smem, size = 0x4, offset = 0x4, fixed_abs, tag = 'smem constant byte address 0x4 - core index']
  #allocation1 [shape = 'u32[72,128]{1,0:T(1,128)}', space=vmem, size = 0x9000, scoped, tag = 'internal scratch']
  #allocation2 [shape = 'f32[4,8,384]{2,1,0:T(8,128)}', space=vmem, size = 0xc000, scoped, tag = 'scratch operand']
  #allocation3 [shape = 'f32[72,512]{1,0:T(8,128)}', space=vmem, size = 0x24000, scoped, tag = 'scratch operand']
  %s0 = inlined_call_operand.vmem [shape: f32[4,4,128], index: 0, kind: input, shape index: {}]
  %s1 = inlined_call_operand.hbm [shape: f32[4,128], index: 1, kind: input, shape index: {}]
  %s2 = inlined_call_operand.hbm [shape: f32[8,36], index: 2, kind: input, shape index: {}]
  %s3 = inlined_call_operand.vmem [shape: f32[8,1], index: 3, kind: input, shape index: {}]
  %s4 = inlined_call_operand.hbm [shape: f32[8,72], index: 4, kind: input, shape index: {}]
  %s5 = inlined_call_operand.vmem [shape: f32[8,1], index: 5, kind: input, shape index: {}]
  %s6 = inlined_call_operand.hbm [shape: f32[8,128], index: 6, kind: output, shape index: {}]
  %s7 = sld [smem:[#allocation0]]
  $region46: #{tpu_custom_call.1} parent=0
    _
  %s9 = ssub.s32 1, %s7
  %s10 = scalar_select 0, %s9, %s7
  $region1: #{tpu_custom_call.1} parent=0
    #allocation4 [shape = 'u8[2048]{0}', space=vmem, size = 0x800, scoped, tag = 'input window, operand 1, single buffered']
    #allocation5 [shape = 's32[1]{0}', space=sflag, size = 0x4, scoped, tag = 'scoped memory for tpu_custom_call.1']
    #allocation6 [shape = 's32[1]{0}', space=sflag, size = 0x4, scoped, tag = 'scoped memory for tpu_custom_call.1']
    #allocation7 [shape = 'u8[4096]{0}', space=vmem, size = 0x1000, scoped, tag = 'input window, operand 2, single buffered']
    #allocation8 [shape = 's32[1]{0}', space=sflag, size = 0x4, scoped, tag = 'scoped memory for tpu_custom_call.1']
    #allocation9 [shape = 'u8[4096]{0}', space=vmem, size = 0x1000, scoped, tag = 'input window, operand 4, single buffered']
    #allocation10 [shape = 'u8[4096]{0}', space=vmem, size = 0x1000, scoped, tag = 'output window, operand 0, single buffered']
    %11 = vsyncpa [#allocation5], 0
    %12 = vsyncpa [#allocation8], 0
    %13 = vsyncpa [#allocation6], 0
    // Predicated region
    $region2: #{tpu_custom_call.1} parent=1 // pred_check
      _
    $region3: #{tpu_custom_call.1} parent=1 // pred_check_branch
      %15 = sbr.rel (0) target = $region5
    $region4: #{tpu_custom_call.1} parent=1 // pred_region
      _
    $region5: #{tpu_custom_call.1} parent=1 // pred_fallthru
      _
    // Predicated region
    $region6: #{tpu_custom_call.1} parent=1 // pred_check
      _
    $region7: #{tpu_custom_call.1} parent=1 // pred_check_branch
      %17 = sbr.rel (0) target = $region9
    $region8: #{tpu_custom_call.1} parent=1 // pred_region
      %19 = vsyncadd [#allocation5], 0
      %s21 = sshll.u32 %s1, 4
      %s22 = int_to_ptr.hbm [resolvable:$true] %s21
      %s23 = sshll.u32 [#allocation4], 4
      %s24 = int_to_ptr.vmem [resolvable:$true] %s23
      %26 = dma.hbm_to_vmem [thread:$0]  %s22, 64, %s24, [#allocation5]
    $region9: #{tpu_custom_call.1} parent=1 // pred_fallthru
      _
    // Predicated region
    $region10: #{tpu_custom_call.1} parent=1 // pred_check
      _
    $region11: #{tpu_custom_call.1} parent=1 // pred_check_branch
      %28 = sbr.rel (0) target = $region13
    $region12: #{tpu_custom_call.1} parent=1 // pred_region
      %30 = vsyncadd [#allocation8], 0
      %s32 = sshll.u32 %s2, 4
      %s33 = int_to_ptr.hbm [resolvable:$true] %s32
      %s34 = sshll.u32 [#allocation7], 4
      %s35 = int_to_ptr.vmem [resolvable:$true] %s34
      %37 = dma.hbm_to_vmem [thread:$0]  %s33, 128, %s35, [#allocation8]
    $region13: #{tpu_custom_call.1} parent=1 // pred_fallthru
      _
    // Predicated region
    $region14: #{tpu_custom_call.1} parent=1 // pred_check
      _
    $region15: #{tpu_custom_call.1} parent=1 // pred_check_branch
      %39 = sbr.rel (0) target = $region17
    $region16: #{tpu_custom_call.1} parent=1 // pred_region
      _
    $region17: #{tpu_custom_call.1} parent=1 // pred_fallthru
      _
    // Predicated region
    $region18: #{tpu_custom_call.1} parent=1 // pred_check
      _
    $region19: #{tpu_custom_call.1} parent=1 // pred_check_branch
      %41 = sbr.rel (0) target = $region21
    $region20: #{tpu_custom_call.1} parent=1 // pred_region
      %43 = vsyncadd [#allocation8], 0
      %s45 = sshll.u32 %s4, 4
      %s46 = int_to_ptr.hbm [resolvable:$true] %s45
      %s47 = sshll.u32 [#allocation9], 4
      %s48 = int_to_ptr.vmem [resolvable:$true] %s47
      %50 = dma.hbm_to_vmem [thread:$0]  %s46, 128, %s48, [#allocation8]
    $region21: #{tpu_custom_call.1} parent=1 // pred_fallthru
      _
    // Predicated region
    $region22: #{tpu_custom_call.1} parent=1 // pred_check
      _
    $region23: #{tpu_custom_call.1} parent=1 // pred_check_branch
      %52 = sbr.rel (0) target = $region25
    $region24: #{tpu_custom_call.1} parent=1 // pred_region
      _
    $region25: #{tpu_custom_call.1} parent=1 // pred_fallthru
      _
    // Predicated region
    $region26: #{tpu_custom_call.1} parent=1 // pred_check
      _
    $region27: #{tpu_custom_call.1} parent=1 // pred_check_branch
      %54 = sbr.rel (0) target = $region29
    $region28: #{tpu_custom_call.1} parent=1 // pred_region
      %56 = dma.done [#allocation5], 64
    $region29: #{tpu_custom_call.1} parent=1 // pred_fallthru
      _
    // Predicated region
    $region30: #{tpu_custom_call.1} parent=1 // pred_check
      _
    $region31: #{tpu_custom_call.1} parent=1 // pred_check_branch
      %58 = sbr.rel (0) target = $region33
    $region32: #{tpu_custom_call.1} parent=1 // pred_region
      %60 = dma.done [#allocation8], 128
    $region33: #{tpu_custom_call.1} parent=1 // pred_fallthru
      _
    // Predicated region
    $region34: #{tpu_custom_call.1} parent=1 // pred_check
      _
    $region35: #{tpu_custom_call.1} parent=1 // pred_check_branch
      %62 = sbr.rel (0) target = $region37
    $region36: #{tpu_custom_call.1} parent=1 // pred_region
      %64 = dma.done [#allocation8], 128
    $region37: #{tpu_custom_call.1} parent=1 // pred_fallthru
      _
    %v65 = vld [vmem:[#allocation4] sm:$0x1]
    %v66 = vld [vmem:[#allocation4 + $0x1] sm:$0x1]
    %v67 = vld [vmem:[#allocation4 + $0x2] sm:$0x1]
    %v68 = vld [vmem:[#allocation4 + $0x3] sm:$0x1]
    %v69 = vld [vmem:[%s0] sm:$0xf]
    %s70 = scalar_lea.vmem %s0, 4
    %v71 = vld [vmem:[%s70] sm:$0xf]
    %s72 = scalar_lea.vmem %s0, 8
    %v73 = vld [vmem:[%s72] sm:$0xf]
    %s74 = scalar_lea.vmem %s0, 12
    %v75 = vld [vmem:[%s74] sm:$0xf]
    %76 = vst [vmem:[#allocation2 + $0x8] sm:$0xf] %v69
    %s77 = scalar_lea.vmem [#allocation2], 24
    %78 = vst [vmem:[%s77 + $0x8] sm:$0xf] %v71
    %s79 = scalar_lea.vmem [#allocation2], 48
    %80 = vst [vmem:[%s79 + $0x8] sm:$0xf] %v73
    %s81 = scalar_lea.vmem [#allocation2], 72
    %82 = vst [vmem:[%s81 + $0x8] sm:$0xf] %v75
    %v83 = vld [vmem:[%s81] sm:$0xf]
    %v84 = vld [vmem:[%s81 + $0x8] sm:$0xf]
    %v85 = vmul.f32 %v65, %v67
    %vm86 = vcmp.gt.f32.partialorder %v85, 0.5
    %v87 = vsel %vm86, 1, 0
    %v88 = vperm.slane %v87, 0
    %vm89 = vcmp.eq.s32.totalorder %v88, 1
    %92 = vrot.lane.b32.xlu0 %v83, 9
    %v93 = vpop.permute.xlu0 %92
    %94 = vrot.lane.b32.xlu0 %v84, 9
    %v95 = vpop.permute.xlu0 %94
    %vm96 = vcmask 72704
    %v97 = vsel %vm96, %v93, %v95
    %v99 = vsel %vm89, %v97, 0.0
    %100 = vst [vmem:[#allocation3] sm:$0xf] %v99
    %v101 = vld [vmem:[%s79] sm:$0xf]
    %v102 = vld [vmem:[%s79 + $0x8] sm:$0xf]
    %vm103 = vcmp.gt.f32.partialorder %v65, 0.5
    %v104 = vsel %vm103, 1, 0
    %v105 = vperm.slane %v104, 0
    %vm106 = vcmp.eq.s32.totalorder %v105, 1
    %109 = vrot.lane.b32.xlu0 %v101, 8
    %v110 = vpop.permute.xlu0 %109
    %111 = vrot.lane.b32.xlu0 %v102, 8
    %v112 = vpop.permute.xlu0 %111
    %vm113 = vcmask 64512
    %v114 = vsel %vm113, %v110, %v112
    %v116 = vsel %vm106, %v114, 0.0
    %v118 = vrot.slane %v116, 4
    %120 = vst [vmem:[#allocation3] sm:$0xf0] %v118
    %v121 = vld [vmem:[%s81] sm:$0xf]
    %v122 = vld [vmem:[%s81 + $0x8] sm:$0xf]
    %125 = vrot.lane.b32.xlu0 %v121, 8
    %v126 = vpop.permute.xlu0 %125
    %127 = vrot.lane.b32.xlu0 %v122, 8
    %v128 = vpop.permute.xlu0 %127
    %v129 = vsel %vm113, %v126, %v128
    %v131 = vsel %vm106, %v129, 0.0
    %132 = vst [vmem:[#allocation3 + $0x20] sm:$0xf] %v131
    %v133 = vld [vmem:[%s77] sm:$0xf]
    %v134 = vld [vmem:[%s77 + $0x8] sm:$0xf]
    %vm135 = vcmp.gt.f32.partialorder %v67, 0.5
    %v136 = vsel %vm135, 1, 0
    %v137 = vperm.slane %v136, 0
    %vm138 = vcmp.eq.s32.totalorder %v137, 1
    %141 = vrot.lane.b32.xlu0 %v133, 1
    %v142 = vpop.permute.xlu0 %141
    %143 = vrot.lane.b32.xlu0 %v134, 1
    %v144 = vpop.permute.xlu0 %143
    %vm145 = vcmask 7168
    %v146 = vsel %vm145, %v142, %v144
    %v148 = vsel %vm138, %v146, 0.0
    %v150 = vrot.slane %v148, 4
    %152 = vst [vmem:[#allocation3 + $0x20] sm:$0xf0] %v150
    %v153 = vld [vmem:[#allocation2 + $0x8] sm:$0xf]
    %154 = vst [vmem:[#allocation3 + $0x40] sm:$0xf] %v153
    %v155 = vld [vmem:[%s77 + $0x8] sm:$0xf]
    %v157 = vrot.slane %v155, 4
    %159 = vst [vmem:[#allocation3 + $0x40] sm:$0xf0] %v157
    %v160 = vld [vmem:[%s81] sm:$0xf]
    %v161 = vld [vmem:[%s81 + $0x8] sm:$0xf]
    %164 = vrot.lane.b32.xlu0 %v160, 1
    %v165 = vpop.permute.xlu0 %164
    %166 = vrot.lane.b32.xlu0 %v161, 1
    %v167 = vpop.permute.xlu0 %166
    %v168 = vsel %vm145, %v165, %v167
    %v170 = vsel %vm138, %v168, 0.0
    %171 = vst [vmem:[#allocation3 + $0x60] sm:$0xf] %v170
    %v172 = vld [vmem:[%s79 + $0x8] sm:$0xf]
    %v174 = vrot.slane %v172, 4
    %176 = vst [vmem:[#allocation3 + $0x60] sm:$0xf0] %v174
    %v177 = vld [vmem:[%s81 + $0x8] sm:$0xf]
    %178 = vst [vmem:[#allocation3 + $0x80] sm:$0xf] %v177
    %179 = vst [vmem:[#allocation3 + $0x8] sm:$0xf] %v116
    %v181 = vrot.slane %v131, 4
    %183 = vst [vmem:[#allocation3 + $0x8] sm:$0xf0] %v181
    %v184 = vld [vmem:[%s79] sm:$0xf]
    %v185 = vld [vmem:[%s79 + $0x8] sm:$0xf]
    %v186 = vmul.f32 %v65, %v68
    %vm187 = vcmp.gt.f32.partialorder %v186, 0.5
    %v188 = vsel %vm187, 1, 0
    %v189 = vperm.slane %v188, 0
    %vm190 = vcmp.eq.s32.totalorder %v189, 1
    %193 = vrot.lane.b32.xlu0 %v184, 7
    %v194 = vpop.permute.xlu0 %193
    %195 = vrot.lane.b32.xlu0 %v185, 7
    %v196 = vpop.permute.xlu0 %195
    %vm197 = vcmask 56320
    %v198 = vsel %vm197, %v194, %v196
    %v200 = vsel %vm190, %v198, 0.0
    %201 = vst [vmem:[#allocation3 + $0x28] sm:$0xf] %v200
    %v203 = vrot.slane %v153, 4
    %205 = vst [vmem:[#allocation3 + $0x28] sm:$0xf0] %v203
    %206 = vst [vmem:[#allocation3 + $0x48] sm:$0xf] %v155
    %v207 = vld [vmem:[#allocation2 + $0x8] sm:$0xf]
    %v208 = vld [vmem:[#allocation2 + $0x10] sm:$0xf]
    %vm209 = vcmp.gt.f32.partialorder %v68, 0.5
    %v210 = vsel %vm209, 1, 0
    %v211 = vperm.slane %v210, 0
    %vm212 = vcmp.eq.s32.totalorder %v211, 1
    %215 = vrot.lane.b32.xlu0 %v207, 127
    %v216 = vpop.permute.xlu0 %215
    %217 = vrot.lane.b32.xlu0 %v208, 127
    %v218 = vpop.permute.xlu0 %217
    %vm219 = vcmask 1039360
    %v220 = vsel %vm219, %v216, %v218
    %v222 = vsel %vm212, %v220, 0.0
    %v224 = vrot.slane %v222, 4
    %226 = vst [vmem:[#allocation3 + $0x48] sm:$0xf0] %v224
    %227 = vst [vmem:[#allocation3 + $0x68] sm:$0xf] %v172
    %v229 = vrot.slane %v177, 4
    %231 = vst [vmem:[#allocation3 + $0x68] sm:$0xf0] %v229
    %v232 = vld [vmem:[%s79 + $0x8] sm:$0xf]
    %v233 = vld [vmem:[%s79 + $0x10] sm:$0xf]
    %236 = vrot.lane.b32.xlu0 %v232, 127
    %v237 = vpop.permute.xlu0 %236
    %238 = vrot.lane.b32.xlu0 %v233, 127
    %v239 = vpop.permute.xlu0 %238
    %v240 = vsel %vm219, %v237, %v239
    %v242 = vsel %vm212, %v240, 0.0
    %243 = vst [vmem:[#allocation3 + $0x88] sm:$0xf] %v242
    %244 = vst [vmem:[#allocation3 + $0x10] sm:$0xf] %v148
    %245 = vst [vmem:[#allocation3 + $0x10] sm:$0xf0] %v203
    %246 = vst [vmem:[#allocation3 + $0x30] sm:$0xf] %v155
    %v248 = vrot.slane %v170, 4
    %250 = vst [vmem:[#allocation3 + $0x30] sm:$0xf0] %v248
    %251 = vst [vmem:[#allocation3 + $0x50] sm:$0xf] %v172
    %252 = vst [vmem:[#allocation3 + $0x50] sm:$0xf0] %v229
    %v253 = vld [vmem:[%s77 + $0x8] sm:$0xf]
    %v254 = vld [vmem:[%s77 + $0x10] sm:$0xf]
    %v255 = vmul.f32 %v66, %v67
    %vm256 = vcmp.gt.f32.partialorder %v255, 0.5
    %v257 = vsel %vm256, 1, 0
    %v258 = vperm.slane %v257, 0
    %vm259 = vcmp.eq.s32.totalorder %v258, 1
    %262 = vrot.lane.b32.xlu0 %v253, 121
    %v263 = vpop.permute.xlu0 %262
    %264 = vrot.lane.b32.xlu0 %v254, 121
    %v265 = vpop.permute.xlu0 %264
    %vm266 = vcmask 990208
    %v267 = vsel %vm266, %v263, %v265
    %v269 = vsel %vm259, %v267, 0.0
    %270 = vst [vmem:[#allocation3 + $0x70] sm:$0xf] %v269
    %v271 = vld [vmem:[#allocation2 + $0x8] sm:$0xf]
    %v272 = vld [vmem:[#allocation2 + $0x10] sm:$0xf]
    %vm273 = vcmp.gt.f32.partialorder %v66, 0.5
    %v274 = vsel %vm273, 1, 0
    %v275 = vperm.slane %v274, 0
    %vm276 = vcmp.eq.s32.totalorder %v275, 1
    %279 = vrot.lane.b32.xlu0 %v271, 120
    %v280 = vpop.permute.xlu0 %279
    %281 = vrot.lane.b32.xlu0 %v272, 120
    %v282 = vpop.permute.xlu0 %281
    %vm283 = vcmask 982016
    %v284 = vsel %vm283, %v280, %v282
    %v286 = vsel %vm276, %v284, 0.0
    %v288 = vrot.slane %v286, 4
    %290 = vst [vmem:[#allocation3 + $0x70] sm:$0xf0] %v288
    %v291 = vld [vmem:[%s77 + $0x8] sm:$0xf]
    %v292 = vld [vmem:[%s77 + $0x10] sm:$0xf]
    %295 = vrot.lane.b32.xlu0 %v291, 120
    %v296 = vpop.permute.xlu0 %295
    %297 = vrot.lane.b32.xlu0 %v292, 120
    %v298 = vpop.permute.xlu0 %297
    %v299 = vsel %vm283, %v296, %v298
    %v301 = vsel %vm276, %v299, 0.0
    %302 = vst [vmem:[#allocation3 + $0x90] sm:$0xf] %v301
    %303 = vst [vmem:[#allocation3 + $0x18] sm:$0xf] %v153
    %304 = vst [vmem:[#allocation3 + $0x18] sm:$0xf0] %v157
    %305 = vst [vmem:[#allocation3 + $0x38] sm:$0xf] %v222
    %306 = vst [vmem:[#allocation3 + $0x38] sm:$0xf0] %v174
    %307 = vst [vmem:[#allocation3 + $0x58] sm:$0xf] %v177
    %v309 = vrot.slane %v242, 4
    %311 = vst [vmem:[#allocation3 + $0x58] sm:$0xf0] %v309
    %312 = vst [vmem:[#allocation3 + $0x78] sm:$0xf] %v286
    %v314 = vrot.slane %v301, 4
    %316 = vst [vmem:[#allocation3 + $0x78] sm:$0xf0] %v314
    %v317 = vld [vmem:[#allocation2 + $0x8] sm:$0xf]
    %v318 = vld [vmem:[#allocation2 + $0x10] sm:$0xf]
    %v319 = vmul.f32 %v66, %v68
    %vm320 = vcmp.gt.f32.partialorder %v319, 0.5
    %v321 = vsel %vm320, 1, 0
    %v322 = vperm.slane %v321, 0
    %vm323 = vcmp.eq.s32.totalorder %v322, 1
    %326 = vrot.lane.b32.xlu0 %v317, 119
    %v327 = vpop.permute.xlu0 %326
    %328 = vrot.lane.b32.xlu0 %v318, 119
    %v329 = vpop.permute.xlu0 %328
    %vm330 = vcmask 973824
    %v331 = vsel %vm330, %v327, %v329
    %v333 = vsel %vm323, %v331, 0.0
    %334 = vst [vmem:[#allocation3 + $0x98] sm:$0xf] %v333
    %v335 = vld [vmem:[#allocation7] sm:$0xff]
    %v336 = vld [vmem:[#allocation3] sm:$0xff]
    %v337 = vld [vmem:[#allocation3 + $0x8] sm:$0xff]
    %v338 = vld [vmem:[#allocation3 + $0x10] sm:$0xff]
    %v339 = vld [vmem:[#allocation3 + $0x18] sm:$0xff]
    %v340 = vld [vmem:[#allocation3 + $0x20] sm:$0xff]
    %v341 = vld [vmem:[#allocation3 + $0x28] sm:$0xff]
    %v342 = vld [vmem:[#allocation3 + $0x30] sm:$0xff]
    %v343 = vld [vmem:[#allocation3 + $0x38] sm:$0xff]
    %v344 = vld [vmem:[#allocation3 + $0x40] sm:$0xff]
    %v345 = vld [vmem:[#allocation3 + $0x48] sm:$0xff]
    %v346 = vld [vmem:[#allocation3 + $0x50] sm:$0xff]
    %v347 = vld [vmem:[#allocation3 + $0x58] sm:$0xff]
    %v348 = vld [vmem:[#allocation3 + $0x60] sm:$0xff]
    %v349 = vld [vmem:[#allocation3 + $0x68] sm:$0xff]
    %v350 = vld [vmem:[#allocation3 + $0x70] sm:$0xff]
    %v351 = vld [vmem:[#allocation3 + $0x78] sm:$0xff]
    %v352 = vld [vmem:[#allocation3 + $0x80] sm:$0xf]
    %v353 = vld [vmem:[#allocation3 + $0x88] sm:$0xf]
    %v354 = vld [vmem:[#allocation3 + $0x90] sm:$0xf]
    %v355 = vld [vmem:[#allocation3 + $0x98] sm:$0xf]
    %v356 = vld [vmem:[%s3] sm:$0xff]
    %358 = vset.pattern.permute.xlu0 0
    %359 = vperm.xlu0 %358, %v356
    %v360 = vpop.permute.xlu0 %359
    %vm362 = vcmask 293888
    %v364 = vsel %vm362, %v335, 0
    %vm366 = vcmask 1043456
    %v368 = vsel %vm366, %v352, 0
    %v371 = vsel %vm366, %v353, 0
    %v374 = vsel %vm366, %v354, 0
    %v377 = vsel %vm366, %v355, 0
    %379 = vmatpush.msra.mxu0 0.0
    %380 = vmatpush.msra.mxu0 0.0
    %381 = vmatpush.msra.mxu0 0.0
    %382 = vmatpush.msra.mxu0 0.0
    %383 = vmatpush.msra.mxu0 0.0
    %384 = vmatpush.msra.mxu0 0.0
    %385 = vmatpush.msra.mxu0 0.0
    %386 = vmatpush.msra.mxu0 0.0
    %387 = vmatpush.msra.mxu0 0.0
    %388 = vmatpush.msra.mxu0 0.0
    %389 = vmatpush.msra.mxu0 0.0
    %390 = vmatpush.msra.mxu0 %v368
    %391 = vmatpush.msra.mxu0 %v348
    %392 = vmatpush.msra.mxu0 %v344
    %393 = vmatpush.msra.mxu0 %v340
    %394 = vmatpush.msra.mxu0 %v336
    %395 = vmatmul.f32.gmra.mxu0 %v364
    %v396 = vpop.f32.mrf.mxu0
    %v397 = vadd.f32 %v360, %v396
    %398 = vdwg.mxu0
    %399 = vmatpush.msra.mxu0 0.0
    %400 = vmatpush.msra.mxu0 0.0
    %401 = vmatpush.msra.mxu0 0.0
    %402 = vmatpush.msra.mxu0 0.0
    %403 = vmatpush.msra.mxu0 0.0
    %404 = vmatpush.msra.mxu0 0.0
    %405 = vmatpush.msra.mxu0 0.0
    %406 = vmatpush.msra.mxu0 0.0
    %407 = vmatpush.msra.mxu0 0.0
    %408 = vmatpush.msra.mxu0 0.0
    %409 = vmatpush.msra.mxu0 0.0
    %410 = vmatpush.msra.mxu0 %v371
    %411 = vmatpush.msra.mxu0 %v349
    %412 = vmatpush.msra.mxu0 %v345
    %413 = vmatpush.msra.mxu0 %v341
    %414 = vmatpush.msra.mxu0 %v337
    %415 = vmatmul.f32.gmra.mxu0 %v364
    %v416 = vpop.f32.mrf.mxu0
    %v417 = vadd.f32 %v360, %v416
    %418 = vdwg.mxu0
    %419 = vmatpush.msra.mxu0 0.0
    %420 = vmatpush.msra.mxu0 0.0
    %421 = vmatpush.msra.mxu0 0.0
    %422 = vmatpush.msra.mxu0 0.0
    %423 = vmatpush.msra.mxu0 0.0
    %424 = vmatpush.msra.mxu0 0.0
    %425 = vmatpush.msra.mxu0 0.0
    %426 = vmatpush.msra.mxu0 0.0
    %427 = vmatpush.msra.mxu0 0.0
    %428 = vmatpush.msra.mxu0 0.0
    %429 = vmatpush.msra.mxu0 0.0
    %430 = vmatpush.msra.mxu0 %v374
    %431 = vmatpush.msra.mxu0 %v350
    %432 = vmatpush.msra.mxu0 %v346
    %433 = vmatpush.msra.mxu0 %v342
    %434 = vmatpush.msra.mxu0 %v338
    %435 = vmatmul.f32.gmra.mxu0 %v364
    %v436 = vpop.f32.mrf.mxu0
    %v437 = vadd.f32 %v360, %v436
    %438 = vdwg.mxu0
    %439 = vmatpush.msra.mxu0 0.0
    %440 = vmatpush.msra.mxu0 0.0
    %441 = vmatpush.msra.mxu0 0.0
    %442 = vmatpush.msra.mxu0 0.0
    %443 = vmatpush.msra.mxu0 0.0
    %444 = vmatpush.msra.mxu0 0.0
    %445 = vmatpush.msra.mxu0 0.0
    %446 = vmatpush.msra.mxu0 0.0
    %447 = vmatpush.msra.mxu0 0.0
    %448 = vmatpush.msra.mxu0 0.0
    %449 = vmatpush.msra.mxu0 0.0
    %450 = vmatpush.msra.mxu0 %v377
    %451 = vmatpush.msra.mxu0 %v351
    %452 = vmatpush.msra.mxu0 %v347
    %453 = vmatpush.msra.mxu0 %v343
    %454 = vmatpush.msra.mxu0 %v339
    %455 = vmatmul.f32.gmra.mxu0 %v364
    %v456 = vpop.f32.mrf.mxu0
    %v457 = vadd.f32 %v360, %v456
    %458 = vdwg.mxu0
    %v459 = vmax.f32 %v397, 0.0
    %v460 = vmax.f32 %v417, 0.0
    %v461 = vmax.f32 %v437, 0.0
    %v462 = vmax.f32 %v457, 0.0
    %463 = vst [vmem:[#allocation2 + $0x8] sm:$0xff] %v459
    %464 = vst [vmem:[%s77 + $0x8] sm:$0xff] %v460
    %465 = vst [vmem:[%s79 + $0x8] sm:$0xff] %v461
    %466 = vst [vmem:[%s81 + $0x8] sm:$0xff] %v462
    %v467 = vld [vmem:[%s81] sm:$0xff]
    %v468 = vld [vmem:[%s81 + $0x8] sm:$0xff]
    %471 = vrot.lane.b32.xlu0 %v467, 9
    %v472 = vpop.permute.xlu0 %471
    %473 = vrot.lane.b32.xlu0 %v468, 9
    %v474 = vpop.permute.xlu0 %473
    %v475 = vsel %vm96, %v472, %v474
    %v477 = vsel %vm89, %v475, 0.0
    %478 = vst [vmem:[#allocation3] sm:$0xff] %v477
    %v479 = vld [vmem:[%s79] sm:$0xff]
    %v480 = vld [vmem:[%s79 + $0x8] sm:$0xff]
    %483 = vrot.lane.b32.xlu0 %v479, 8
    %v484 = vpop.permute.xlu0 %483
    %485 = vrot.lane.b32.xlu0 %v480, 8
    %v486 = vpop.permute.xlu0 %485
    %v487 = vsel %vm113, %v484, %v486
    %v489 = vsel %vm106, %v487, 0.0
    %490 = vst [vmem:[#allocation3 + $0x20] sm:$0xff] %v489
    %v491 = vld [vmem:[%s81] sm:$0xff]
    %v492 = vld [vmem:[%s81 + $0x8] sm:$0xff]
    %495 = vrot.lane.b32.xlu0 %v491, 8
    %v496 = vpop.permute.xlu0 %495
    %497 = vrot.lane.b32.xlu0 %v492, 8
    %v498 = vpop.permute.xlu0 %497
    %v499 = vsel %vm113, %v496, %v498
    %v501 = vsel %vm106, %v499, 0.0
    %502 = vst [vmem:[#allocation3 + $0x40] sm:$0xff] %v501
    %v503 = vld [vmem:[%s77] sm:$0xff]
    %v504 = vld [vmem:[%s77 + $0x8] sm:$0xff]
    %507 = vrot.lane.b32.xlu0 %v503, 1
    %v508 = vpop.permute.xlu0 %507
    %509 = vrot.lane.b32.xlu0 %v504, 1
    %v510 = vpop.permute.xlu0 %509
    %v511 = vsel %vm145, %v508, %v510
    %v513 = vsel %vm138, %v511, 0.0
    %514 = vst [vmem:[#allocation3 + $0x60] sm:$0xff] %v513
    %v515 = vld [vmem:[#allocation2 + $0x8] sm:$0xff]
    %516 = vst [vmem:[#allocation3 + $0x80] sm:$0xff] %v515
    %v517 = vld [vmem:[%s77 + $0x8] sm:$0xff]
    %518 = vst [vmem:[#allocation3 + $0xa0] sm:$0xff] %v517
    %v519 = vld [vmem:[%s81] sm:$0xff]
    %v520 = vld [vmem:[%s81 + $0x8] sm:$0xff]
    %523 = vrot.lane.b32.xlu0 %v519, 1
    %v524 = vpop.permute.xlu0 %523
    %525 = vrot.lane.b32.xlu0 %v520, 1
    %v526 = vpop.permute.xlu0 %525
    %v527 = vsel %vm145, %v524, %v526
    %v529 = vsel %vm138, %v527, 0.0
    %530 = vst [vmem:[#allocation3 + $0xc0] sm:$0xff] %v529
    %v531 = vld [vmem:[%s79 + $0x8] sm:$0xff]
    %532 = vst [vmem:[#allocation3 + $0xe0] sm:$0xff] %v531
    %v533 = vld [vmem:[%s81 + $0x8] sm:$0xff]
    %534 = vst [vmem:[#allocation3 + $0x100] sm:$0xff] %v533
    %535 = vst [vmem:[#allocation3 + $0x8] sm:$0xff] %v489
    %536 = vst [vmem:[#allocation3 + $0x28] sm:$0xff] %v501
    %v537 = vld [vmem:[%s79] sm:$0xff]
    %v538 = vld [vmem:[%s79 + $0x8] sm:$0xff]
    %541 = vrot.lane.b32.xlu0 %v537, 7
    %v542 = vpop.permute.xlu0 %541
    %543 = vrot.lane.b32.xlu0 %v538, 7
    %v544 = vpop.permute.xlu0 %543
    %v545 = vsel %vm197, %v542, %v544
    %v547 = vsel %vm190, %v545, 0.0
    %548 = vst [vmem:[#allocation3 + $0x48] sm:$0xff] %v547
    %549 = vst [vmem:[#allocation3 + $0x68] sm:$0xff] %v515
    %550 = vst [vmem:[#allocation3 + $0x88] sm:$0xff] %v517
    %v551 = vld [vmem:[#allocation2 + $0x8] sm:$0xff]
    %v552 = vld [vmem:[#allocation2 + $0x10] sm:$0xff]
    %555 = vrot.lane.b32.xlu0 %v551, 127
    %v556 = vpop.permute.xlu0 %555
    %557 = vrot.lane.b32.xlu0 %v552, 127
    %v558 = vpop.permute.xlu0 %557
    %v559 = vsel %vm219, %v556, %v558
    %v561 = vsel %vm212, %v559, 0.0
    %562 = vst [vmem:[#allocation3 + $0xa8] sm:$0xff] %v561
    %563 = vst [vmem:[#allocation3 + $0xc8] sm:$0xff] %v531
    %564 = vst [vmem:[#allocation3 + $0xe8] sm:$0xff] %v533
    %v565 = vld [vmem:[%s79 + $0x8] sm:$0xff]
    %v566 = vld [vmem:[%s79 + $0x10] sm:$0xff]
    %569 = vrot.lane.b32.xlu0 %v565, 127
    %v570 = vpop.permute.xlu0 %569
    %571 = vrot.lane.b32.xlu0 %v566, 127
    %v572 = vpop.permute.xlu0 %571
    %v573 = vsel %vm219, %v570, %v572
    %v575 = vsel %vm212, %v573, 0.0
    %576 = vst [vmem:[#allocation3 + $0x108] sm:$0xff] %v575
    %577 = vst [vmem:[#allocation3 + $0x10] sm:$0xff] %v513
    %578 = vst [vmem:[#allocation3 + $0x30] sm:$0xff] %v515
    %579 = vst [vmem:[#allocation3 + $0x50] sm:$0xff] %v517
    %580 = vst [vmem:[#allocation3 + $0x70] sm:$0xff] %v529
    %581 = vst [vmem:[#allocation3 + $0x90] sm:$0xff] %v531
    %582 = vst [vmem:[#allocation3 + $0xb0] sm:$0xff] %v533
    %v583 = vld [vmem:[%s77 + $0x8] sm:$0xff]
    %v584 = vld [vmem:[%s77 + $0x10] sm:$0xff]
    %587 = vrot.lane.b32.xlu0 %v583, 121
    %v588 = vpop.permute.xlu0 %587
    %589 = vrot.lane.b32.xlu0 %v584, 121
    %v590 = vpop.permute.xlu0 %589
    %v591 = vsel %vm266, %v588, %v590
    %v593 = vsel %vm259, %v591, 0.0
    %594 = vst [vmem:[#allocation3 + $0xd0] sm:$0xff] %v593
    %v595 = vld [vmem:[#allocation2 + $0x8] sm:$0xff]
    %v596 = vld [vmem:[#allocation2 + $0x10] sm:$0xff]
    %599 = vrot.lane.b32.xlu0 %v595, 120
    %v600 = vpop.permute.xlu0 %599
    %601 = vrot.lane.b32.xlu0 %v596, 120
    %v602 = vpop.permute.xlu0 %601
    %v603 = vsel %vm283, %v600, %v602
    %v605 = vsel %vm276, %v603, 0.0
    %606 = vst [vmem:[#allocation3 + $0xf0] sm:$0xff] %v605
    %v607 = vld [vmem:[%s77 + $0x8] sm:$0xff]
    %v608 = vld [vmem:[%s77 + $0x10] sm:$0xff]
    %611 = vrot.lane.b32.xlu0 %v607, 120
    %v612 = vpop.permute.xlu0 %611
    %613 = vrot.lane.b32.xlu0 %v608, 120
    %v614 = vpop.permute.xlu0 %613
    %v615 = vsel %vm283, %v612, %v614
    %v617 = vsel %vm276, %v615, 0.0
    %618 = vst [vmem:[#allocation3 + $0x110] sm:$0xff] %v617
    %619 = vst [vmem:[#allocation3 + $0x18] sm:$0xff] %v515
    %620 = vst [vmem:[#allocation3 + $0x38] sm:$0xff] %v517
    %621 = vst [vmem:[#allocation3 + $0x58] sm:$0xff] %v561
    %622 = vst [vmem:[#allocation3 + $0x78] sm:$0xff] %v531
    %623 = vst [vmem:[#allocation3 + $0x98] sm:$0xff] %v533
    %624 = vst [vmem:[#allocation3 + $0xb8] sm:$0xff] %v575
    %625 = vst [vmem:[#allocation3 + $0xd8] sm:$0xff] %v605
    %626 = vst [vmem:[#allocation3 + $0xf8] sm:$0xff] %v617
    %v627 = vld [vmem:[#allocation2 + $0x8] sm:$0xff]
    %v628 = vld [vmem:[#allocation2 + $0x10] sm:$0xff]
    %631 = vrot.lane.b32.xlu0 %v627, 119
    %v632 = vpop.permute.xlu0 %631
    %633 = vrot.lane.b32.xlu0 %v628, 119
    %v634 = vpop.permute.xlu0 %633
    %v635 = vsel %vm330, %v632, %v634
    %v637 = vsel %vm323, %v635, 0.0
    %638 = vst [vmem:[#allocation3 + $0x118] sm:$0xff] %v637
    %v639 = vld [vmem:[#allocation9] sm:$0xff]
    %v640 = vld [vmem:[#allocation3] sm:$0xff]
    %v641 = vld [vmem:[#allocation3 + $0x8] sm:$0xff]
    %v642 = vld [vmem:[#allocation3 + $0x10] sm:$0xff]
    %v643 = vld [vmem:[#allocation3 + $0x18] sm:$0xff]
    %v644 = vld [vmem:[#allocation3 + $0x20] sm:$0xff]
    %v645 = vld [vmem:[#allocation3 + $0x28] sm:$0xff]
    %v646 = vld [vmem:[#allocation3 + $0x30] sm:$0xff]
    %v647 = vld [vmem:[#allocation3 + $0x38] sm:$0xff]
    %v648 = vld [vmem:[#allocation3 + $0x40] sm:$0xff]
    %v649 = vld [vmem:[#allocation3 + $0x48] sm:$0xff]
    %v650 = vld [vmem:[#allocation3 + $0x50] sm:$0xff]
    %v651 = vld [vmem:[#allocation3 + $0x58] sm:$0xff]
    %v652 = vld [vmem:[#allocation3 + $0x60] sm:$0xff]
    %v653 = vld [vmem:[#allocation3 + $0x68] sm:$0xff]
    %v654 = vld [vmem:[#allocation3 + $0x70] sm:$0xff]
    %v655 = vld [vmem:[#allocation3 + $0x78] sm:$0xff]
    %v656 = vld [vmem:[#allocation3 + $0x80] sm:$0xff]
    %v657 = vld [vmem:[#allocation3 + $0x88] sm:$0xff]
    %v658 = vld [vmem:[#allocation3 + $0x90] sm:$0xff]
    %v659 = vld [vmem:[#allocation3 + $0x98] sm:$0xff]
    %v660 = vld [vmem:[#allocation3 + $0xa0] sm:$0xff]
    %v661 = vld [vmem:[#allocation3 + $0xa8] sm:$0xff]
    %v662 = vld [vmem:[#allocation3 + $0xb0] sm:$0xff]
    %v663 = vld [vmem:[#allocation3 + $0xb8] sm:$0xff]
    %v664 = vld [vmem:[#allocation3 + $0xc0] sm:$0xff]
    %v665 = vld [vmem:[#allocation3 + $0xc8] sm:$0xff]
    %v666 = vld [vmem:[#allocation3 + $0xd0] sm:$0xff]
    %v667 = vld [vmem:[#allocation3 + $0xd8] sm:$0xff]
    %v668 = vld [vmem:[#allocation3 + $0xe0] sm:$0xff]
    %v669 = vld [vmem:[#allocation3 + $0xe8] sm:$0xff]
    %v670 = vld [vmem:[#allocation3 + $0xf0] sm:$0xff]
    %v671 = vld [vmem:[#allocation3 + $0xf8] sm:$0xff]
    %v672 = vld [vmem:[#allocation3 + $0x100] sm:$0xff]
    %v673 = vld [vmem:[#allocation3 + $0x108] sm:$0xff]
    %v674 = vld [vmem:[#allocation3 + $0x110] sm:$0xff]
    %v675 = vld [vmem:[#allocation3 + $0x118] sm:$0xff]
    %v676 = vld [vmem:[%s5] sm:$0xff]
    %678 = vset.pattern.permute.xlu0 0
    %679 = vperm.xlu0 %678, %v676
    %v680 = vpop.permute.xlu0 %679
    %vm682 = vcmask 588800
    %v684 = vsel %vm682, %v639, 0
    %686 = vmatpush.msra.mxu0 0.0
    %687 = vmatpush.msra.mxu0 0.0
    %688 = vmatpush.msra.mxu0 0.0
    %689 = vmatpush.msra.mxu0 0.0
    %690 = vmatpush.msra.mxu0 0.0
    %691 = vmatpush.msra.mxu0 0.0
    %692 = vmatpush.msra.mxu0 0.0
    %693 = vmatpush.msra.mxu0 %v672
    %694 = vmatpush.msra.mxu0 %v668
    %695 = vmatpush.msra.mxu0 %v664
    %696 = vmatpush.msra.mxu0 %v660
    %697 = vmatpush.msra.mxu0 %v656
    %698 = vmatpush.msra.mxu0 %v652
    %699 = vmatpush.msra.mxu0 %v648
    %700 = vmatpush.msra.mxu0 %v644
    %701 = vmatpush.msra.mxu0 %v640
    %702 = vmatmul.f32.gmra.mxu0 %v684
    %v703 = vpop.f32.mrf.mxu0
    %v704 = vadd.f32 %v680, %v703
    %705 = vdwg.mxu0
    %706 = vmatpush.msra.mxu0 0.0
    %707 = vmatpush.msra.mxu0 0.0
    %708 = vmatpush.msra.mxu0 0.0
    %709 = vmatpush.msra.mxu0 0.0
    %710 = vmatpush.msra.mxu0 0.0
    %711 = vmatpush.msra.mxu0 0.0
    %712 = vmatpush.msra.mxu0 0.0
    %713 = vmatpush.msra.mxu0 %v673
    %714 = vmatpush.msra.mxu0 %v669
    %715 = vmatpush.msra.mxu0 %v665
    %716 = vmatpush.msra.mxu0 %v661
    %717 = vmatpush.msra.mxu0 %v657
    %718 = vmatpush.msra.mxu0 %v653
    %719 = vmatpush.msra.mxu0 %v649
    %720 = vmatpush.msra.mxu0 %v645
    %721 = vmatpush.msra.mxu0 %v641
    %722 = vmatmul.f32.gmra.mxu0 %v684
    %v723 = vpop.f32.mrf.mxu0
    %v724 = vadd.f32 %v680, %v723
    %725 = vdwg.mxu0
    %726 = vmatpush.msra.mxu0 0.0
    %727 = vmatpush.msra.mxu0 0.0
    %728 = vmatpush.msra.mxu0 0.0
    %729 = vmatpush.msra.mxu0 0.0
    %730 = vmatpush.msra.mxu0 0.0
    %731 = vmatpush.msra.mxu0 0.0
    %732 = vmatpush.msra.mxu0 0.0
    %733 = vmatpush.msra.mxu0 %v674
    %734 = vmatpush.msra.mxu0 %v670
    %735 = vmatpush.msra.mxu0 %v666
    %736 = vmatpush.msra.mxu0 %v662
    %737 = vmatpush.msra.mxu0 %v658
    %738 = vmatpush.msra.mxu0 %v654
    %739 = vmatpush.msra.mxu0 %v650
    %740 = vmatpush.msra.mxu0 %v646
    %741 = vmatpush.msra.mxu0 %v642
    %742 = vmatmul.f32.gmra.mxu0 %v684
    %v743 = vpop.f32.mrf.mxu0
    %v744 = vadd.f32 %v680, %v743
    %745 = vdwg.mxu0
    %746 = vmatpush.msra.mxu0 0.0
    %747 = vmatpush.msra.mxu0 0.0
    %748 = vmatpush.msra.mxu0 0.0
    %749 = vmatpush.msra.mxu0 0.0
    %750 = vmatpush.msra.mxu0 0.0
    %751 = vmatpush.msra.mxu0 0.0
    %752 = vmatpush.msra.mxu0 0.0
    %753 = vmatpush.msra.mxu0 %v675
    %754 = vmatpush.msra.mxu0 %v671
    %755 = vmatpush.msra.mxu0 %v667
    %756 = vmatpush.msra.mxu0 %v663
    %757 = vmatpush.msra.mxu0 %v659
    %758 = vmatpush.msra.mxu0 %v655
    %759 = vmatpush.msra.mxu0 %v651
    %760 = vmatpush.msra.mxu0 %v647
    %761 = vmatpush.msra.mxu0 %v643
    %762 = vmatmul.f32.gmra.mxu0 %v684
    %v763 = vpop.f32.mrf.mxu0
    %v764 = vadd.f32 %v680, %v763
    %765 = vdwg.mxu0
    %v766 = vmax.f32 %v704, 0.0
    %v767 = vmax.f32 %v724, 0.0
    %v768 = vmax.f32 %v744, 0.0
    %v769 = vmax.f32 %v764, 0.0
    %v770 = vmax.f32 %v766, %v767
    %v771 = vmax.f32 %v768, %v769
    %v772 = vmax.f32 %v770, %v771
    %773 = vst [vmem:[#allocation10] sm:$0xff] %v772
    // Predicated region
    $region38: #{tpu_custom_call.1} parent=1 // pred_check
      _
    $region39: #{tpu_custom_call.1} parent=1 // pred_check_branch
      %775 = sbr.rel (0) target = $region41
    $region40: #{tpu_custom_call.1} parent=1 // pred_region
      %777 = vsyncadd [#allocation6], 0
      %s779 = sshll.u32 [#allocation10], 4
      %s780 = int_to_ptr.vmem [resolvable:$true] %s779
      %s781 = sshll.u32 %s6, 4
      %s782 = int_to_ptr.hbm [resolvable:$true] %s781
      %784 = dma.vmem_to_hbm [thread:$0]  %s780, 128, %s782, [#allocation6]
    $region41: #{tpu_custom_call.1} parent=1 // pred_fallthru
      _
    // Predicated region
    $region42: #{tpu_custom_call.1} parent=1 // pred_check
      _
    $region43: #{tpu_custom_call.1} parent=1 // pred_check_branch
      %786 = sbr.rel (0) target = $region45
    $region44: #{tpu_custom_call.1} parent=1 // pred_region
      %788 = dma.done [#allocation6], 128
    $region45: #{tpu_custom_call.1} parent=1 // pred_fallthru
      _
    %789 = vsyncpa [#allocation5], 1
    %790 = vsyncpa [#allocation8], 1
    %791 = vsyncpa [#allocation6], 1

</llo_original>
